<compile_context>
chip_gen: v5e
topology: v5e:2x2
jax: 0.10.0
libtpu: 0.0.40
codegen_flags: <defaults>
</compile_context>

<pallas_src>
import jax
import jax.numpy as jnp
from jax.experimental import pallas as pl
from jax.experimental.pallas import tpu as pltpu


def _round_up(x, m):
    return ((x + m - 1) // m) * m


# ----------------------------------------------------------------------------
# Single fused forward kernel (everything resident in VMEM, one invocation)
# ----------------------------------------------------------------------------
def _fused_forward_kernel(x_img_ref, emb_ref,
                          w_ih_ref, b_i_ref, w_hh_ref, b_hn_ref,
                          w_img_ref, b_img_ref, w_cap_ref, b_cap_ref,
                          w_heads_ref, b_heads_ref, out_ref):
    Bp = x_img_ref.shape[0]          # padded batch (multiple of 8)
    E = w_hh_ref.shape[1]            # token embedding / GRU hidden size
    N = emb_ref.shape[0]             # L * Bp, time-major flattened tokens
    L = N // Bp

    # ---- image branch: identity image net -> joint embedding linear --------
    # bf16 operands, f32 accumulation on the MXU.
    img_emb = (jnp.dot(x_img_ref[...], w_img_ref[...],
                       preferred_element_type=jnp.float32) + b_img_ref[...])

    # ---- caption branch -----------------------------------------------------
    # GRU input projection for ALL timesteps at once, per gate (r, z, n).
    # r/z biases already include the corresponding b_hh terms (folded in the
    # wrapper); only b_hn must stay inside the recurrence.
    emb = emb_ref[...]                                                   # (N, E) bf16
    gi_r = (jnp.dot(emb, w_ih_ref[0], preferred_element_type=jnp.float32)
            + b_i_ref[0])                                                # (N, E)
    gi_z = (jnp.dot(emb, w_ih_ref[1], preferred_element_type=jnp.float32)
            + b_i_ref[1])
    gi_n = (jnp.dot(emb, w_ih_ref[2], preferred_element_type=jnp.float32)
            + b_i_ref[2])

    w_hh_r = w_hh_ref[0]                                                 # (E, E) f32
    w_hh_z = w_hh_ref[1]
    w_hh_n = w_hh_ref[2]
    b_hn = b_hn_ref[...]                                                 # (1, E)

    # Serial GRU recurrence (only h @ W_hh is sequential). L is small and
    # static so the loop is fully unrolled with tile-aligned static slices.
    h = jnp.zeros((Bp, E), jnp.float32)
    for t in range(L):
        lo = t * Bp
        hi = lo + Bp
        h_r = jnp.dot(h, w_hh_r, preferred_element_type=jnp.float32)
        h_z = jnp.dot(h, w_hh_z, preferred_element_type=jnp.float32)
        h_n = jnp.dot(h, w_hh_n, preferred_element_type=jnp.float32) + b_hn
        r = jax.nn.sigmoid(gi_r[lo:hi] + h_r)
        z = jax.nn.sigmoid(gi_z[lo:hi] + h_z)
        n = jnp.tanh(gi_n[lo:hi] + r * h_n)
        h = (1.0 - z) * n + z * h

    cap_emb = (jnp.dot(h.astype(w_cap_ref.dtype), w_cap_ref[...],
                       preferred_element_type=jnp.float32) + b_cap_ref[...])

    # ---- fusion + concatenated heads (single lane-dense 128-wide output) ---
    fusion = img_emb + cap_emb
    out_ref[...] = (jnp.dot(fusion.astype(w_heads_ref.dtype), w_heads_ref[...],
                            preferred_element_type=jnp.float32)
                    + b_heads_ref[...])


# ----------------------------------------------------------------------------
# Model wrapper
# ----------------------------------------------------------------------------
def init_params(key, vocab_size, token_embedding_size, joint_embedding_size,
                intent_dims, semiotic_dims, contextual_dims):
    E, J = token_embedding_size, joint_embedding_size
    ks = jax.random.split(key, 16)
    s = 0.02

    def w(k, shape):
        return jax.random.normal(k, shape, jnp.float32) * s

    return dict(
        emb_table=w(ks[0], (vocab_size, E)),
        # image_joint_embedding_layer: Linear(512, J)
        w_img=w(ks[1], (512, J)), b_img=w(ks[2], (J,)),
        # caption_GRU(E, E, 1)  (weights transposed, gate order r,z,n)
        w_ih=w(ks[3], (E, 3 * E)), w_hh=w(ks[4], (E, 3 * E)),
        b_ih=w(ks[5], (3 * E,)), b_hh=w(ks[6], (3 * E,)),
        # caption_joint_embedding_layer: Linear(E, J)
        w_cap=w(ks[7], (E, J)), b_cap=w(ks[8], (J,)),
        # prediction heads
        w_int=w(ks[9], (J, intent_dims)), b_int=w(ks[10], (intent_dims,)),
        w_sem=w(ks[11], (J, semiotic_dims)), b_sem=w(ks[12], (semiotic_dims,)),
        w_ctx=w(ks[13], (J, contextual_dims)), b_ctx=w(ks[14], (contextual_dims,)),
    )


@jax.jit
def model_forward(params, x_img, x_caption):
    B, L = x_caption.shape
    V, E = params["emb_table"].shape
    J = params["w_img"].shape[1]
    d_int = params["w_int"].shape[1]
    d_sem = params["w_sem"].shape[1]
    d_ctx = params["w_ctx"].shape[1]
    d_all = d_int + d_sem + d_ctx

    Bp = _round_up(max(B, 8), 8)            # pad batch to f32 sublane width
    HP = _round_up(max(d_all, 128), 128)    # lane-dense concatenated head width

    # --- pad / repack inputs (tiny, fused by XLA under jit) ------------------
    x_img_p = jnp.zeros((Bp, x_img.shape[1]), jnp.bfloat16).at[:B].set(
        x_img.astype(jnp.bfloat16))
    cap_p = jnp.zeros((Bp, L), jnp.int32).at[:B].set(
        jnp.clip(x_caption.astype(jnp.int32), 0, V - 1))

    # Embedding gather OUTSIDE the kernel: (Bp, L, E) -> time-major (L*Bp, E).
    emb = jnp.take(params["emb_table"], cap_p, axis=0)            # (Bp, L, E) f32
    emb_tm = jnp.transpose(emb, (1, 0, 2)).reshape(L * Bp, E).astype(jnp.bfloat16)

    # --- GRU weights with a leading gate dim (r, z, n); fold b_hh(r,z) -------
    w_ih = params["w_ih"]                    # (E, 3E)
    w_hh = params["w_hh"]                    # (E, 3E)
    b_ih = params["b_ih"]                    # (3E,)
    b_hh = params["b_hh"]                    # (3E,)
    w_ih_rzn = jnp.stack(
        [w_ih[:, :E], w_ih[:, E:2 * E], w_ih[:, 2 * E:]]).astype(jnp.bfloat16)
    w_hh_rzn = jnp.stack(
        [w_hh[:, :E], w_hh[:, E:2 * E], w_hh[:, 2 * E:]]).astype(jnp.float32)
    b_i_rzn = jnp.stack([
        b_ih[:E] + b_hh[:E],                 # r: fold b_hh_r
        b_ih[E:2 * E] + b_hh[E:2 * E],       # z: fold b_hh_z
        b_ih[2 * E:],                        # n: b_ih only (b_hn stays in loop)
    ]).reshape(3, 1, E).astype(jnp.float32)
    b_hn = b_hh[2 * E:].reshape(1, E).astype(jnp.float32)

    # --- concatenate + pad head weights into one (J, HP) matrix --------------
    w_heads = jnp.zeros((J, HP), jnp.float32)
    w_heads = w_heads.at[:, :d_int].set(params["w_int"])
    w_heads = w_heads.at[:, d_int:d_int + d_sem].set(params["w_sem"])
    w_heads = w_heads.at[:, d_int + d_sem:d_all].set(params["w_ctx"])
    w_heads = w_heads.astype(jnp.bfloat16)
    b_heads = jnp.zeros((1, HP), jnp.float32)
    b_heads = b_heads.at[0, :d_int].set(params["b_int"])
    b_heads = b_heads.at[0, d_int:d_int + d_sem].set(params["b_sem"])
    b_heads = b_heads.at[0, d_int + d_sem:d_all].set(params["b_ctx"])

    N = L * Bp
    flops = 2 * (Bp * 512 * J            # image joint embedding
                 + 3 * N * E * E         # GRU input projection (all steps)
                 + 3 * L * Bp * E * E    # GRU recurrence
                 + Bp * E * J            # caption joint embedding
                 + Bp * J * HP)          # fused heads
    transcendentals = 3 * L * Bp * E     # 2x sigmoid + 1x tanh per step
    operands = (x_img_p, emb_tm, w_ih_rzn, b_i_rzn, w_hh_rzn, b_hn,
                params["w_img"].astype(jnp.bfloat16),
                params["b_img"].reshape(1, J).astype(jnp.float32),
                params["w_cap"].astype(jnp.bfloat16),
                params["b_cap"].reshape(1, J).astype(jnp.float32),
                w_heads, b_heads)
    bytes_accessed = sum(int(o.size) * o.dtype.itemsize for o in operands) \
        + Bp * HP * 4

    out = pl.pallas_call(
        _fused_forward_kernel,
        out_shape=jax.ShapeDtypeStruct((Bp, HP), jnp.float32),
        compiler_params=pltpu.CompilerParams(
            # Explicit, conservative budget: fits v7x's 64 MiB physical VMEM
            # and v5e/v6e scoped limits; actual use here is well under 1 MiB
            # since nothing resident scales with vocabulary any more.
            vmem_limit_bytes=32 * 1024 * 1024),
        cost_estimate=pl.CostEstimate(flops=int(flops),
                                      transcendentals=int(transcendentals),
                                      bytes_accessed=int(bytes_accessed)),
    )(*operands)

    return {
        "intent": out[:B, :d_int],
        "semiotic": out[:B, d_int:d_int + d_sem],
        "contextual": out[:B, d_int + d_sem:d_all],
    }


# ----------------------------------------------------------------------------
# Pure-JAX reference for correctness checking (f32 end-to-end)
# ----------------------------------------------------------------------------
def model_forward_ref(params, x_img, x_caption):
    E = params["emb_table"].shape[1]
    img_emb = x_img @ params["w_img"] + params["b_img"]

    emb = jnp.take(params["emb_table"], x_caption, axis=0)   # (B, L, E)
    B, L, _ = emb.shape
    h = jnp.zeros((B, E), jnp.float32)
    for t in range(L):
        x_t = emb[:, t, :]
        gi = x_t @ params["w_ih"] + params["b_ih"]
        gh = h @ params["w_hh"] + params["b_hh"]
        i_r, i_z, i_n = gi[:, :E], gi[:, E:2 * E], gi[:, 2 * E:]
        h_r, h_z, h_n = gh[:, :E], gh[:, E:2 * E], gh[:, 2 * E:]
        r = jax.nn.sigmoid(i_r + h_r)
        z = jax.nn.sigmoid(i_z + h_z)
        n = jnp.tanh(i_n + r * h_n)
        h = (1.0 - z) * n + z * h
    cap_emb = h @ params["w_cap"] + params["b_cap"]

    fusion = img_emb + cap_emb
    return {
        "intent": fusion @ params["w_int"] + params["b_int"],
        "semiotic": fusion @ params["w_sem"] + params["b_sem"],
        "contextual": fusion @ params["w_ctx"] + params["b_ctx"],
    }


if __name__ == "__main__":
    # small, deterministic configuration
    vocab_size = 64
    token_embedding_size = 128
    joint_embedding_size = 128
    intent_dims, semiotic_dims, contextual_dims = 7, 3, 3
    B, L = 2, 8

    key = jax.random.PRNGKey(0)
    k_params, k_img, k_cap = jax.random.split(key, 3)

    params = init_params(k_params, vocab_size, token_embedding_size,
                         joint_embedding_size, intent_dims, semiotic_dims,
                         contextual_dims)

    x_img = jax.random.normal(k_img, (B, 512), jnp.float32)
    x_caption = jax.random.randint(k_cap, (B, L), 0, vocab_size, jnp.int32)

    out = model_forward(params, x_img, x_caption)
    out = jax.tree_util.tree_map(jax.block_until_ready, out)

    ref = model_forward_ref(params, x_img, x_caption)
    # bf16 MXU operands (with f32 accumulation) => relaxed tolerance vs f32 ref.
    for name in ("intent", "semiotic", "contextual"):
        assert out[name].shape == ref[name].shape, name
        assert jnp.allclose(out[name], ref[name], atol=1e-2, rtol=1e-2), name

    print("KERNEL_OK")
</pallas_src>

<mosaic_0001>
module attributes {stable_mosaic.version = 11 : i64} {
  func.func @_fused_forward_kernel(%arg0: memref<8x512xbf16, #tpu.memory_space<vmem>>, %arg1: memref<64x128xbf16, #tpu.memory_space<vmem>>, %arg2: memref<3x128x128xbf16, #tpu.memory_space<vmem>>, %arg3: memref<3x1x128xf32, #tpu.memory_space<vmem>>, %arg4: memref<3x128x128xf32, #tpu.memory_space<vmem>>, %arg5: memref<1x128xf32, #tpu.memory_space<vmem>>, %arg6: memref<512x128xbf16, #tpu.memory_space<vmem>>, %arg7: memref<1x128xf32, #tpu.memory_space<vmem>>, %arg8: memref<128x128xbf16, #tpu.memory_space<vmem>>, %arg9: memref<1x128xf32, #tpu.memory_space<vmem>>, %arg10: memref<128x128xbf16, #tpu.memory_space<vmem>>, %arg11: memref<1x128xf32, #tpu.memory_space<vmem>>, %arg12: memref<8x128xf32, #tpu.memory_space<vmem>>) attributes {dimension_semantics = [], scalar_prefetch = 0 : i64, scratch_operands = 0 : i64, tpu.core_type = #tpu.core_type<tc>} {
    %c0 = arith.constant 0 : index
    %c0_0 = arith.constant 0 : index
    %0 = vector.load %arg0[%c0, %c0_0] : memref<8x512xbf16, #tpu.memory_space<vmem>>, vector<8x512xbf16>
    %c0_1 = arith.constant 0 : index
    %c0_2 = arith.constant 0 : index
    %1 = vector.load %arg6[%c0_1, %c0_2] : memref<512x128xbf16, #tpu.memory_space<vmem>>, vector<512x128xbf16>
    %cst = arith.constant dense<0.000000e+00> : vector<8x128xf32>
    %2 = tpu.matmul %0, %1, %cst {dimension_numbers = #tpu.dot_dimension_numbers<[1], [0], [0], [1], [0, 0, 1, 1], [], []>} : vector<8x512xbf16>, vector<512x128xbf16>, vector<8x128xf32> -> vector<8x128xf32>
    %c0_3 = arith.constant 0 : index
    %c0_4 = arith.constant 0 : index
    %3 = vector.load %arg7[%c0_3, %c0_4] : memref<1x128xf32, #tpu.memory_space<vmem>>, vector<1x128xf32>
    %4 = vector.broadcast %3 : vector<1x128xf32> to vector<8x128xf32>
    %5 = arith.addf %2, %4 : vector<8x128xf32>
    %c0_5 = arith.constant 0 : index
    %c0_6 = arith.constant 0 : index
    %6 = vector.load %arg1[%c0_5, %c0_6] : memref<64x128xbf16, #tpu.memory_space<vmem>>, vector<64x128xbf16>
    %c0_7 = arith.constant 0 : index
    %c0_8 = arith.constant 0 : index
    %c0_9 = arith.constant 0 : index
    %7 = vector.load %arg2[%c0_7, %c0_8, %c0_9] : memref<3x128x128xbf16, #tpu.memory_space<vmem>>, vector<1x128x128xbf16>
    %8 = vector.shape_cast %7 : vector<1x128x128xbf16> to vector<128x128xbf16>
    %cst_10 = arith.constant dense<0.000000e+00> : vector<64x128xf32>
    %9 = tpu.matmul %6, %8, %cst_10 {dimension_numbers = #tpu.dot_dimension_numbers<[1], [0], [0], [1], [0, 0, 1, 1], [], []>} : vector<64x128xbf16>, vector<128x128xbf16>, vector<64x128xf32> -> vector<64x128xf32>
    %c0_11 = arith.constant 0 : index
    %c0_12 = arith.constant 0 : index
    %c0_13 = arith.constant 0 : index
    %10 = vector.load %arg3[%c0_11, %c0_12, %c0_13] : memref<3x1x128xf32, #tpu.memory_space<vmem>>, vector<1x1x128xf32>
    %11 = vector.shape_cast %10 : vector<1x1x128xf32> to vector<1x128xf32>
    %12 = vector.broadcast %11 : vector<1x128xf32> to vector<64x128xf32>
    %13 = arith.addf %9, %12 : vector<64x128xf32>
    %c1 = arith.constant 1 : index
    %c0_14 = arith.constant 0 : index
    %c0_15 = arith.constant 0 : index
    %14 = vector.load %arg2[%c1, %c0_14, %c0_15] : memref<3x128x128xbf16, #tpu.memory_space<vmem>>, vector<1x128x128xbf16>
    %15 = vector.shape_cast %14 : vector<1x128x128xbf16> to vector<128x128xbf16>
    %cst_16 = arith.constant dense<0.000000e+00> : vector<64x128xf32>
    %16 = tpu.matmul %6, %15, %cst_16 {dimension_numbers = #tpu.dot_dimension_numbers<[1], [0], [0], [1], [0, 0, 1, 1], [], []>} : vector<64x128xbf16>, vector<128x128xbf16>, vector<64x128xf32> -> vector<64x128xf32>
    %c1_17 = arith.constant 1 : index
    %c0_18 = arith.constant 0 : index
    %c0_19 = arith.constant 0 : index
    %17 = vector.load %arg3[%c1_17, %c0_18, %c0_19] : memref<3x1x128xf32, #tpu.memory_space<vmem>>, vector<1x1x128xf32>
    %18 = vector.shape_cast %17 : vector<1x1x128xf32> to vector<1x128xf32>
    %19 = vector.broadcast %18 : vector<1x128xf32> to vector<64x128xf32>
    %20 = arith.addf %16, %19 : vector<64x128xf32>
    %c2 = arith.constant 2 : index
    %c0_20 = arith.constant 0 : index
    %c0_21 = arith.constant 0 : index
    %21 = vector.load %arg2[%c2, %c0_20, %c0_21] : memref<3x128x128xbf16, #tpu.memory_space<vmem>>, vector<1x128x128xbf16>
    %22 = vector.shape_cast %21 : vector<1x128x128xbf16> to vector<128x128xbf16>
    %cst_22 = arith.constant dense<0.000000e+00> : vector<64x128xf32>
    %23 = tpu.matmul %6, %22, %cst_22 {dimension_numbers = #tpu.dot_dimension_numbers<[1], [0], [0], [1], [0, 0, 1, 1], [], []>} : vector<64x128xbf16>, vector<128x128xbf16>, vector<64x128xf32> -> vector<64x128xf32>
    %c2_23 = arith.constant 2 : index
    %c0_24 = arith.constant 0 : index
    %c0_25 = arith.constant 0 : index
    %24 = vector.load %arg3[%c2_23, %c0_24, %c0_25] : memref<3x1x128xf32, #tpu.memory_space<vmem>>, vector<1x1x128xf32>
    %25 = vector.shape_cast %24 : vector<1x1x128xf32> to vector<1x128xf32>
    %26 = vector.broadcast %25 : vector<1x128xf32> to vector<64x128xf32>
    %27 = arith.addf %23, %26 : vector<64x128xf32>
    %c0_26 = arith.constant 0 : index
    %c0_27 = arith.constant 0 : index
    %c0_28 = arith.constant 0 : index
    %28 = vector.load %arg4[%c0_26, %c0_27, %c0_28] : memref<3x128x128xf32, #tpu.memory_space<vmem>>, vector<1x128x128xf32>
    %29 = vector.shape_cast %28 : vector<1x128x128xf32> to vector<128x128xf32>
    %c1_29 = arith.constant 1 : index
    %c0_30 = arith.constant 0 : index
    %c0_31 = arith.constant 0 : index
    %30 = vector.load %arg4[%c1_29, %c0_30, %c0_31] : memref<3x128x128xf32, #tpu.memory_space<vmem>>, vector<1x128x128xf32>
    %31 = vector.shape_cast %30 : vector<1x128x128xf32> to vector<128x128xf32>
    %c2_32 = arith.constant 2 : index
    %c0_33 = arith.constant 0 : index
    %c0_34 = arith.constant 0 : index
    %32 = vector.load %arg4[%c2_32, %c0_33, %c0_34] : memref<3x128x128xf32, #tpu.memory_space<vmem>>, vector<1x128x128xf32>
    %33 = vector.shape_cast %32 : vector<1x128x128xf32> to vector<128x128xf32>
    %c0_35 = arith.constant 0 : index
    %c0_36 = arith.constant 0 : index
    %34 = vector.load %arg5[%c0_35, %c0_36] : memref<1x128xf32, #tpu.memory_space<vmem>>, vector<1x128xf32>
    %cst_37 = arith.constant 0.000000e+00 : f32
    %35 = vector.broadcast %cst_37 : f32 to vector<8x128xf32>
    %cst_38 = arith.constant dense<0.000000e+00> : vector<8x128xf32>
    %36 = tpu.matmul %35, %29, %cst_38 {dimension_numbers = #tpu.dot_dimension_numbers<[1], [0], [0], [1], [0, 0, 1, 1], [], []>} : vector<8x128xf32>, vector<128x128xf32>, vector<8x128xf32> -> vector<8x128xf32>
    %cst_39 = arith.constant dense<0.000000e+00> : vector<8x128xf32>
    %37 = tpu.matmul %35, %31, %cst_39 {dimension_numbers = #tpu.dot_dimension_numbers<[1], [0], [0], [1], [0, 0, 1, 1], [], []>} : vector<8x128xf32>, vector<128x128xf32>, vector<8x128xf32> -> vector<8x128xf32>
    %cst_40 = arith.constant dense<0.000000e+00> : vector<8x128xf32>
    %38 = tpu.matmul %35, %33, %cst_40 {dimension_numbers = #tpu.dot_dimension_numbers<[1], [0], [0], [1], [0, 0, 1, 1], [], []>} : vector<8x128xf32>, vector<128x128xf32>, vector<8x128xf32> -> vector<8x128xf32>
    %39 = vector.broadcast %34 : vector<1x128xf32> to vector<8x128xf32>
    %40 = arith.addf %38, %39 : vector<8x128xf32>
    %41 = vector.extract_strided_slice %13 {offsets = [0, 0], sizes = [8, 128], strides = [1, 1]} : vector<64x128xf32> to vector<8x128xf32>
    %42 = arith.addf %41, %36 : vector<8x128xf32>
    %43 = arith.negf %42 : vector<8x128xf32>
    %44 = math.exp %43 : vector<8x128xf32>
    %cst_41 = arith.constant 1.000000e+00 : f32
    %45 = vector.broadcast %cst_41 : f32 to vector<8x128xf32>
    %46 = arith.addf %45, %44 : vector<8x128xf32>
    %47 = arith.divf %45, %46 : vector<8x128xf32>
    %48 = vector.extract_strided_slice %20 {offsets = [0, 0], sizes = [8, 128], strides = [1, 1]} : vector<64x128xf32> to vector<8x128xf32>
    %49 = arith.addf %48, %37 : vector<8x128xf32>
    %50 = arith.negf %49 : vector<8x128xf32>
    %51 = math.exp %50 : vector<8x128xf32>
    %cst_42 = arith.constant 1.000000e+00 : f32
    %52 = vector.broadcast %cst_42 : f32 to vector<8x128xf32>
    %53 = arith.addf %52, %51 : vector<8x128xf32>
    %54 = arith.divf %52, %53 : vector<8x128xf32>
    %55 = vector.extract_strided_slice %27 {offsets = [0, 0], sizes = [8, 128], strides = [1, 1]} : vector<64x128xf32> to vector<8x128xf32>
    %56 = arith.mulf %47, %40 : vector<8x128xf32>
    %57 = arith.addf %55, %56 : vector<8x128xf32>
    %58 = math.tanh %57 : vector<8x128xf32>
    %cst_43 = arith.constant 1.000000e+00 : f32
    %59 = vector.broadcast %cst_43 : f32 to vector<8x128xf32>
    %60 = arith.subf %59, %54 : vector<8x128xf32>
    %61 = arith.mulf %60, %58 : vector<8x128xf32>
    %62 = arith.mulf %54, %35 : vector<8x128xf32>
    %63 = arith.addf %61, %62 : vector<8x128xf32>
    %cst_44 = arith.constant dense<0.000000e+00> : vector<8x128xf32>
    %64 = tpu.matmul %63, %29, %cst_44 {dimension_numbers = #tpu.dot_dimension_numbers<[1], [0], [0], [1], [0, 0, 1, 1], [], []>} : vector<8x128xf32>, vector<128x128xf32>, vector<8x128xf32> -> vector<8x128xf32>
    %cst_45 = arith.constant dense<0.000000e+00> : vector<8x128xf32>
    %65 = tpu.matmul %63, %31, %cst_45 {dimension_numbers = #tpu.dot_dimension_numbers<[1], [0], [0], [1], [0, 0, 1, 1], [], []>} : vector<8x128xf32>, vector<128x128xf32>, vector<8x128xf32> -> vector<8x128xf32>
    %cst_46 = arith.constant dense<0.000000e+00> : vector<8x128xf32>
    %66 = tpu.matmul %63, %33, %cst_46 {dimension_numbers = #tpu.dot_dimension_numbers<[1], [0], [0], [1], [0, 0, 1, 1], [], []>} : vector<8x128xf32>, vector<128x128xf32>, vector<8x128xf32> -> vector<8x128xf32>
    %67 = vector.broadcast %34 : vector<1x128xf32> to vector<8x128xf32>
    %68 = arith.addf %66, %67 : vector<8x128xf32>
    %69 = vector.extract_strided_slice %13 {offsets = [8, 0], sizes = [8, 128], strides = [1, 1]} : vector<64x128xf32> to vector<8x128xf32>
    %70 = arith.addf %69, %64 : vector<8x128xf32>
    %71 = arith.negf %70 : vector<8x128xf32>
    %72 = math.exp %71 : vector<8x128xf32>
    %cst_47 = arith.constant 1.000000e+00 : f32
    %73 = vector.broadcast %cst_47 : f32 to vector<8x128xf32>
    %74 = arith.addf %73, %72 : vector<8x128xf32>
    %75 = arith.divf %73, %74 : vector<8x128xf32>
    %76 = vector.extract_strided_slice %20 {offsets = [8, 0], sizes = [8, 128], strides = [1, 1]} : vector<64x128xf32> to vector<8x128xf32>
    %77 = arith.addf %76, %65 : vector<8x128xf32>
    %78 = arith.negf %77 : vector<8x128xf32>
    %79 = math.exp %78 : vector<8x128xf32>
    %cst_48 = arith.constant 1.000000e+00 : f32
    %80 = vector.broadcast %cst_48 : f32 to vector<8x128xf32>
    %81 = arith.addf %80, %79 : vector<8x128xf32>
    %82 = arith.divf %80, %81 : vector<8x128xf32>
    %83 = vector.extract_strided_slice %27 {offsets = [8, 0], sizes = [8, 128], strides = [1, 1]} : vector<64x128xf32> to vector<8x128xf32>
    %84 = arith.mulf %75, %68 : vector<8x128xf32>
    %85 = arith.addf %83, %84 : vector<8x128xf32>
    %86 = math.tanh %85 : vector<8x128xf32>
    %cst_49 = arith.constant 1.000000e+00 : f32
    %87 = vector.broadcast %cst_49 : f32 to vector<8x128xf32>
    %88 = arith.subf %87, %82 : vector<8x128xf32>
    %89 = arith.mulf %88, %86 : vector<8x128xf32>
    %90 = arith.mulf %82, %63 : vector<8x128xf32>
    %91 = arith.addf %89, %90 : vector<8x128xf32>
    %cst_50 = arith.constant dense<0.000000e+00> : vector<8x128xf32>
    %92 = tpu.matmul %91, %29, %cst_50 {dimension_numbers = #tpu.dot_dimension_numbers<[1], [0], [0], [1], [0, 0, 1, 1], [], []>} : vector<8x128xf32>, vector<128x128xf32>, vector<8x128xf32> -> vector<8x128xf32>
    %cst_51 = arith.constant dense<0.000000e+00> : vector<8x128xf32>
    %93 = tpu.matmul %91, %31, %cst_51 {dimension_numbers = #tpu.dot_dimension_numbers<[1], [0], [0], [1], [0, 0, 1, 1], [], []>} : vector<8x128xf32>, vector<128x128xf32>, vector<8x128xf32> -> vector<8x128xf32>
    %cst_52 = arith.constant dense<0.000000e+00> : vector<8x128xf32>
    %94 = tpu.matmul %91, %33, %cst_52 {dimension_numbers = #tpu.dot_dimension_numbers<[1], [0], [0], [1], [0, 0, 1, 1], [], []>} : vector<8x128xf32>, vector<128x128xf32>, vector<8x128xf32> -> vector<8x128xf32>
    %95 = vector.broadcast %34 : vector<1x128xf32> to vector<8x128xf32>
    %96 = arith.addf %94, %95 : vector<8x128xf32>
    %97 = vector.extract_strided_slice %13 {offsets = [16, 0], sizes = [8, 128], strides = [1, 1]} : vector<64x128xf32> to vector<8x128xf32>
    %98 = arith.addf %97, %92 : vector<8x128xf32>
    %99 = arith.negf %98 : vector<8x128xf32>
    %100 = math.exp %99 : vector<8x128xf32>
    %cst_53 = arith.constant 1.000000e+00 : f32
    %101 = vector.broadcast %cst_53 : f32 to vector<8x128xf32>
    %102 = arith.addf %101, %100 : vector<8x128xf32>
    %103 = arith.divf %101, %102 : vector<8x128xf32>
    %104 = vector.extract_strided_slice %20 {offsets = [16, 0], sizes = [8, 128], strides = [1, 1]} : vector<64x128xf32> to vector<8x128xf32>
    %105 = arith.addf %104, %93 : vector<8x128xf32>
    %106 = arith.negf %105 : vector<8x128xf32>
    %107 = math.exp %106 : vector<8x128xf32>
    %cst_54 = arith.constant 1.000000e+00 : f32
    %108 = vector.broadcast %cst_54 : f32 to vector<8x128xf32>
    %109 = arith.addf %108, %107 : vector<8x128xf32>
    %110 = arith.divf %108, %109 : vector<8x128xf32>
    %111 = vector.extract_strided_slice %27 {offsets = [16, 0], sizes = [8, 128], strides = [1, 1]} : vector<64x128xf32> to vector<8x128xf32>
    %112 = arith.mulf %103, %96 : vector<8x128xf32>
    %113 = arith.addf %111, %112 : vector<8x128xf32>
    %114 = math.tanh %113 : vector<8x128xf32>
    %cst_55 = arith.constant 1.000000e+00 : f32
    %115 = vector.broadcast %cst_55 : f32 to vector<8x128xf32>
    %116 = arith.subf %115, %110 : vector<8x128xf32>
    %117 = arith.mulf %116, %114 : vector<8x128xf32>
    %118 = arith.mulf %110, %91 : vector<8x128xf32>
    %119 = arith.addf %117, %118 : vector<8x128xf32>
    %cst_56 = arith.constant dense<0.000000e+00> : vector<8x128xf32>
    %120 = tpu.matmul %119, %29, %cst_56 {dimension_numbers = #tpu.dot_dimension_numbers<[1], [0], [0], [1], [0, 0, 1, 1], [], []>} : vector<8x128xf32>, vector<128x128xf32>, vector<8x128xf32> -> vector<8x128xf32>
    %cst_57 = arith.constant dense<0.000000e+00> : vector<8x128xf32>
    %121 = tpu.matmul %119, %31, %cst_57 {dimension_numbers = #tpu.dot_dimension_numbers<[1], [0], [0], [1], [0, 0, 1, 1], [], []>} : vector<8x128xf32>, vector<128x128xf32>, vector<8x128xf32> -> vector<8x128xf32>
    %cst_58 = arith.constant dense<0.000000e+00> : vector<8x128xf32>
    %122 = tpu.matmul %119, %33, %cst_58 {dimension_numbers = #tpu.dot_dimension_numbers<[1], [0], [0], [1], [0, 0, 1, 1], [], []>} : vector<8x128xf32>, vector<128x128xf32>, vector<8x128xf32> -> vector<8x128xf32>
    %123 = vector.broadcast %34 : vector<1x128xf32> to vector<8x128xf32>
    %124 = arith.addf %122, %123 : vector<8x128xf32>
    %125 = vector.extract_strided_slice %13 {offsets = [24, 0], sizes = [8, 128], strides = [1, 1]} : vector<64x128xf32> to vector<8x128xf32>
    %126 = arith.addf %125, %120 : vector<8x128xf32>
    %127 = arith.negf %126 : vector<8x128xf32>
    %128 = math.exp %127 : vector<8x128xf32>
    %cst_59 = arith.constant 1.000000e+00 : f32
    %129 = vector.broadcast %cst_59 : f32 to vector<8x128xf32>
    %130 = arith.addf %129, %128 : vector<8x128xf32>
    %131 = arith.divf %129, %130 : vector<8x128xf32>
    %132 = vector.extract_strided_slice %20 {offsets = [24, 0], sizes = [8, 128], strides = [1, 1]} : vector<64x128xf32> to vector<8x128xf32>
    %133 = arith.addf %132, %121 : vector<8x128xf32>
    %134 = arith.negf %133 : vector<8x128xf32>
    %135 = math.exp %134 : vector<8x128xf32>
    %cst_60 = arith.constant 1.000000e+00 : f32
    %136 = vector.broadcast %cst_60 : f32 to vector<8x128xf32>
    %137 = arith.addf %136, %135 : vector<8x128xf32>
    %138 = arith.divf %136, %137 : vector<8x128xf32>
    %139 = vector.extract_strided_slice %27 {offsets = [24, 0], sizes = [8, 128], strides = [1, 1]} : vector<64x128xf32> to vector<8x128xf32>
    %140 = arith.mulf %131, %124 : vector<8x128xf32>
    %141 = arith.addf %139, %140 : vector<8x128xf32>
    %142 = math.tanh %141 : vector<8x128xf32>
    %cst_61 = arith.constant 1.000000e+00 : f32
    %143 = vector.broadcast %cst_61 : f32 to vector<8x128xf32>
    %144 = arith.subf %143, %138 : vector<8x128xf32>
    %145 = arith.mulf %144, %142 : vector<8x128xf32>
    %146 = arith.mulf %138, %119 : vector<8x128xf32>
    %147 = arith.addf %145, %146 : vector<8x128xf32>
    %cst_62 = arith.constant dense<0.000000e+00> : vector<8x128xf32>
    %148 = tpu.matmul %147, %29, %cst_62 {dimension_numbers = #tpu.dot_dimension_numbers<[1], [0], [0], [1], [0, 0, 1, 1], [], []>} : vector<8x128xf32>, vector<128x128xf32>, vector<8x128xf32> -> vector<8x128xf32>
    %cst_63 = arith.constant dense<0.000000e+00> : vector<8x128xf32>
    %149 = tpu.matmul %147, %31, %cst_63 {dimension_numbers = #tpu.dot_dimension_numbers<[1], [0], [0], [1], [0, 0, 1, 1], [], []>} : vector<8x128xf32>, vector<128x128xf32>, vector<8x128xf32> -> vector<8x128xf32>
    %cst_64 = arith.constant dense<0.000000e+00> : vector<8x128xf32>
    %150 = tpu.matmul %147, %33, %cst_64 {dimension_numbers = #tpu.dot_dimension_numbers<[1], [0], [0], [1], [0, 0, 1, 1], [], []>} : vector<8x128xf32>, vector<128x128xf32>, vector<8x128xf32> -> vector<8x128xf32>
    %151 = vector.broadcast %34 : vector<1x128xf32> to vector<8x128xf32>
    %152 = arith.addf %150, %151 : vector<8x128xf32>
    %153 = vector.extract_strided_slice %13 {offsets = [32, 0], sizes = [8, 128], strides = [1, 1]} : vector<64x128xf32> to vector<8x128xf32>
    %154 = arith.addf %153, %148 : vector<8x128xf32>
    %155 = arith.negf %154 : vector<8x128xf32>
    %156 = math.exp %155 : vector<8x128xf32>
    %cst_65 = arith.constant 1.000000e+00 : f32
    %157 = vector.broadcast %cst_65 : f32 to vector<8x128xf32>
    %158 = arith.addf %157, %156 : vector<8x128xf32>
    %159 = arith.divf %157, %158 : vector<8x128xf32>
    %160 = vector.extract_strided_slice %20 {offsets = [32, 0], sizes = [8, 128], strides = [1, 1]} : vector<64x128xf32> to vector<8x128xf32>
    %161 = arith.addf %160, %149 : vector<8x128xf32>
    %162 = arith.negf %161 : vector<8x128xf32>
    %163 = math.exp %162 : vector<8x128xf32>
    %cst_66 = arith.constant 1.000000e+00 : f32
    %164 = vector.broadcast %cst_66 : f32 to vector<8x128xf32>
    %165 = arith.addf %164, %163 : vector<8x128xf32>
    %166 = arith.divf %164, %165 : vector<8x128xf32>
    %167 = vector.extract_strided_slice %27 {offsets = [32, 0], sizes = [8, 128], strides = [1, 1]} : vector<64x128xf32> to vector<8x128xf32>
    %168 = arith.mulf %159, %152 : vector<8x128xf32>
    %169 = arith.addf %167, %168 : vector<8x128xf32>
    %170 = math.tanh %169 : vector<8x128xf32>
    %cst_67 = arith.constant 1.000000e+00 : f32
    %171 = vector.broadcast %cst_67 : f32 to vector<8x128xf32>
    %172 = arith.subf %171, %166 : vector<8x128xf32>
    %173 = arith.mulf %172, %170 : vector<8x128xf32>
    %174 = arith.mulf %166, %147 : vector<8x128xf32>
    %175 = arith.addf %173, %174 : vector<8x128xf32>
    %cst_68 = arith.constant dense<0.000000e+00> : vector<8x128xf32>
    %176 = tpu.matmul %175, %29, %cst_68 {dimension_numbers = #tpu.dot_dimension_numbers<[1], [0], [0], [1], [0, 0, 1, 1], [], []>} : vector<8x128xf32>, vector<128x128xf32>, vector<8x128xf32> -> vector<8x128xf32>
    %cst_69 = arith.constant dense<0.000000e+00> : vector<8x128xf32>
    %177 = tpu.matmul %175, %31, %cst_69 {dimension_numbers = #tpu.dot_dimension_numbers<[1], [0], [0], [1], [0, 0, 1, 1], [], []>} : vector<8x128xf32>, vector<128x128xf32>, vector<8x128xf32> -> vector<8x128xf32>
    %cst_70 = arith.constant dense<0.000000e+00> : vector<8x128xf32>
    %178 = tpu.matmul %175, %33, %cst_70 {dimension_numbers = #tpu.dot_dimension_numbers<[1], [0], [0], [1], [0, 0, 1, 1], [], []>} : vector<8x128xf32>, vector<128x128xf32>, vector<8x128xf32> -> vector<8x128xf32>
    %179 = vector.broadcast %34 : vector<1x128xf32> to vector<8x128xf32>
    %180 = arith.addf %178, %179 : vector<8x128xf32>
    %181 = vector.extract_strided_slice %13 {offsets = [40, 0], sizes = [8, 128], strides = [1, 1]} : vector<64x128xf32> to vector<8x128xf32>
    %182 = arith.addf %181, %176 : vector<8x128xf32>
    %183 = arith.negf %182 : vector<8x128xf32>
    %184 = math.exp %183 : vector<8x128xf32>
    %cst_71 = arith.constant 1.000000e+00 : f32
    %185 = vector.broadcast %cst_71 : f32 to vector<8x128xf32>
    %186 = arith.addf %185, %184 : vector<8x128xf32>
    %187 = arith.divf %185, %186 : vector<8x128xf32>
    %188 = vector.extract_strided_slice %20 {offsets = [40, 0], sizes = [8, 128], strides = [1, 1]} : vector<64x128xf32> to vector<8x128xf32>
    %189 = arith.addf %188, %177 : vector<8x128xf32>
    %190 = arith.negf %189 : vector<8x128xf32>
    %191 = math.exp %190 : vector<8x128xf32>
    %cst_72 = arith.constant 1.000000e+00 : f32
    %192 = vector.broadcast %cst_72 : f32 to vector<8x128xf32>
    %193 = arith.addf %192, %191 : vector<8x128xf32>
    %194 = arith.divf %192, %193 : vector<8x128xf32>
    %195 = vector.extract_strided_slice %27 {offsets = [40, 0], sizes = [8, 128], strides = [1, 1]} : vector<64x128xf32> to vector<8x128xf32>
    %196 = arith.mulf %187, %180 : vector<8x128xf32>
    %197 = arith.addf %195, %196 : vector<8x128xf32>
    %198 = math.tanh %197 : vector<8x128xf32>
    %cst_73 = arith.constant 1.000000e+00 : f32
    %199 = vector.broadcast %cst_73 : f32 to vector<8x128xf32>
    %200 = arith.subf %199, %194 : vector<8x128xf32>
    %201 = arith.mulf %200, %198 : vector<8x128xf32>
    %202 = arith.mulf %194, %175 : vector<8x128xf32>
    %203 = arith.addf %201, %202 : vector<8x128xf32>
    %cst_74 = arith.constant dense<0.000000e+00> : vector<8x128xf32>
    %204 = tpu.matmul %203, %29, %cst_74 {dimension_numbers = #tpu.dot_dimension_numbers<[1], [0], [0], [1], [0, 0, 1, 1], [], []>} : vector<8x128xf32>, vector<128x128xf32>, vector<8x128xf32> -> vector<8x128xf32>
    %cst_75 = arith.constant dense<0.000000e+00> : vector<8x128xf32>
    %205 = tpu.matmul %203, %31, %cst_75 {dimension_numbers = #tpu.dot_dimension_numbers<[1], [0], [0], [1], [0, 0, 1, 1], [], []>} : vector<8x128xf32>, vector<128x128xf32>, vector<8x128xf32> -> vector<8x128xf32>
    %cst_76 = arith.constant dense<0.000000e+00> : vector<8x128xf32>
    %206 = tpu.matmul %203, %33, %cst_76 {dimension_numbers = #tpu.dot_dimension_numbers<[1], [0], [0], [1], [0, 0, 1, 1], [], []>} : vector<8x128xf32>, vector<128x128xf32>, vector<8x128xf32> -> vector<8x128xf32>
    %207 = vector.broadcast %34 : vector<1x128xf32> to vector<8x128xf32>
    %208 = arith.addf %206, %207 : vector<8x128xf32>
    %209 = vector.extract_strided_slice %13 {offsets = [48, 0], sizes = [8, 128], strides = [1, 1]} : vector<64x128xf32> to vector<8x128xf32>
    %210 = arith.addf %209, %204 : vector<8x128xf32>
    %211 = arith.negf %210 : vector<8x128xf32>
    %212 = math.exp %211 : vector<8x128xf32>
    %cst_77 = arith.constant 1.000000e+00 : f32
    %213 = vector.broadcast %cst_77 : f32 to vector<8x128xf32>
    %214 = arith.addf %213, %212 : vector<8x128xf32>
    %215 = arith.divf %213, %214 : vector<8x128xf32>
    %216 = vector.extract_strided_slice %20 {offsets = [48, 0], sizes = [8, 128], strides = [1, 1]} : vector<64x128xf32> to vector<8x128xf32>
    %217 = arith.addf %216, %205 : vector<8x128xf32>
    %218 = arith.negf %217 : vector<8x128xf32>
    %219 = math.exp %218 : vector<8x128xf32>
    %cst_78 = arith.constant 1.000000e+00 : f32
    %220 = vector.broadcast %cst_78 : f32 to vector<8x128xf32>
    %221 = arith.addf %220, %219 : vector<8x128xf32>
    %222 = arith.divf %220, %221 : vector<8x128xf32>
    %223 = vector.extract_strided_slice %27 {offsets = [48, 0], sizes = [8, 128], strides = [1, 1]} : vector<64x128xf32> to vector<8x128xf32>
    %224 = arith.mulf %215, %208 : vector<8x128xf32>
    %225 = arith.addf %223, %224 : vector<8x128xf32>
    %226 = math.tanh %225 : vector<8x128xf32>
    %cst_79 = arith.constant 1.000000e+00 : f32
    %227 = vector.broadcast %cst_79 : f32 to vector<8x128xf32>
    %228 = arith.subf %227, %222 : vector<8x128xf32>
    %229 = arith.mulf %228, %226 : vector<8x128xf32>
    %230 = arith.mulf %222, %203 : vector<8x128xf32>
    %231 = arith.addf %229, %230 : vector<8x128xf32>
    %cst_80 = arith.constant dense<0.000000e+00> : vector<8x128xf32>
    %232 = tpu.matmul %231, %29, %cst_80 {dimension_numbers = #tpu.dot_dimension_numbers<[1], [0], [0], [1], [0, 0, 1, 1], [], []>} : vector<8x128xf32>, vector<128x128xf32>, vector<8x128xf32> -> vector<8x128xf32>
    %cst_81 = arith.constant dense<0.000000e+00> : vector<8x128xf32>
    %233 = tpu.matmul %231, %31, %cst_81 {dimension_numbers = #tpu.dot_dimension_numbers<[1], [0], [0], [1], [0, 0, 1, 1], [], []>} : vector<8x128xf32>, vector<128x128xf32>, vector<8x128xf32> -> vector<8x128xf32>
    %cst_82 = arith.constant dense<0.000000e+00> : vector<8x128xf32>
    %234 = tpu.matmul %231, %33, %cst_82 {dimension_numbers = #tpu.dot_dimension_numbers<[1], [0], [0], [1], [0, 0, 1, 1], [], []>} : vector<8x128xf32>, vector<128x128xf32>, vector<8x128xf32> -> vector<8x128xf32>
    %235 = vector.broadcast %34 : vector<1x128xf32> to vector<8x128xf32>
    %236 = arith.addf %234, %235 : vector<8x128xf32>
    %237 = vector.extract_strided_slice %13 {offsets = [56, 0], sizes = [8, 128], strides = [1, 1]} : vector<64x128xf32> to vector<8x128xf32>
    %238 = arith.addf %237, %232 : vector<8x128xf32>
    %239 = arith.negf %238 : vector<8x128xf32>
    %240 = math.exp %239 : vector<8x128xf32>
    %cst_83 = arith.constant 1.000000e+00 : f32
    %241 = vector.broadcast %cst_83 : f32 to vector<8x128xf32>
    %242 = arith.addf %241, %240 : vector<8x128xf32>
    %243 = arith.divf %241, %242 : vector<8x128xf32>
    %244 = vector.extract_strided_slice %20 {offsets = [56, 0], sizes = [8, 128], strides = [1, 1]} : vector<64x128xf32> to vector<8x128xf32>
    %245 = arith.addf %244, %233 : vector<8x128xf32>
    %246 = arith.negf %245 : vector<8x128xf32>
    %247 = math.exp %246 : vector<8x128xf32>
    %cst_84 = arith.constant 1.000000e+00 : f32
    %248 = vector.broadcast %cst_84 : f32 to vector<8x128xf32>
    %249 = arith.addf %248, %247 : vector<8x128xf32>
    %250 = arith.divf %248, %249 : vector<8x128xf32>
    %251 = vector.extract_strided_slice %27 {offsets = [56, 0], sizes = [8, 128], strides = [1, 1]} : vector<64x128xf32> to vector<8x128xf32>
    %252 = arith.mulf %243, %236 : vector<8x128xf32>
    %253 = arith.addf %251, %252 : vector<8x128xf32>
    %254 = math.tanh %253 : vector<8x128xf32>
    %cst_85 = arith.constant 1.000000e+00 : f32
    %255 = vector.broadcast %cst_85 : f32 to vector<8x128xf32>
    %256 = arith.subf %255, %250 : vector<8x128xf32>
    %257 = arith.mulf %256, %254 : vector<8x128xf32>
    %258 = arith.mulf %250, %231 : vector<8x128xf32>
    %259 = arith.addf %257, %258 : vector<8x128xf32>
    %260 = arith.truncf %259 : vector<8x128xf32> to vector<8x128xbf16>
    %c0_86 = arith.constant 0 : index
    %c0_87 = arith.constant 0 : index
    %261 = vector.load %arg8[%c0_86, %c0_87] : memref<128x128xbf16, #tpu.memory_space<vmem>>, vector<128x128xbf16>
    %cst_88 = arith.constant dense<0.000000e+00> : vector<8x128xf32>
    %262 = tpu.matmul %260, %261, %cst_88 {dimension_numbers = #tpu.dot_dimension_numbers<[1], [0], [0], [1], [0, 0, 1, 1], [], []>} : vector<8x128xbf16>, vector<128x128xbf16>, vector<8x128xf32> -> vector<8x128xf32>
    %c0_89 = arith.constant 0 : index
    %c0_90 = arith.constant 0 : index
    %263 = vector.load %arg9[%c0_89, %c0_90] : memref<1x128xf32, #tpu.memory_space<vmem>>, vector<1x128xf32>
    %264 = vector.broadcast %263 : vector<1x128xf32> to vector<8x128xf32>
    %265 = arith.addf %262, %264 : vector<8x128xf32>
    %266 = arith.addf %5, %265 : vector<8x128xf32>
    %267 = arith.truncf %266 : vector<8x128xf32> to vector<8x128xbf16>
    %c0_91 = arith.constant 0 : index
    %c0_92 = arith.constant 0 : index
    %268 = vector.load %arg10[%c0_91, %c0_92] : memref<128x128xbf16, #tpu.memory_space<vmem>>, vector<128x128xbf16>
    %cst_93 = arith.constant dense<0.000000e+00> : vector<8x128xf32>
    %269 = tpu.matmul %267, %268, %cst_93 {dimension_numbers = #tpu.dot_dimension_numbers<[1], [0], [0], [1], [0, 0, 1, 1], [], []>} : vector<8x128xbf16>, vector<128x128xbf16>, vector<8x128xf32> -> vector<8x128xf32>
    %c0_94 = arith.constant 0 : index
    %c0_95 = arith.constant 0 : index
    %270 = vector.load %arg11[%c0_94, %c0_95] : memref<1x128xf32, #tpu.memory_space<vmem>>, vector<1x128xf32>
    %271 = vector.broadcast %270 : vector<1x128xf32> to vector<8x128xf32>
    %272 = arith.addf %269, %271 : vector<8x128xf32>
    %c0_96 = arith.constant 0 : index
    %c0_97 = arith.constant 0 : index
    %273 = vector.load %arg12[%c0_96, %c0_97] : memref<8x128xf32, #tpu.memory_space<vmem>>, vector<8x128xf32>
    tpu.vector_store %arg12[%c0_96, %c0_97], %272 {strides = array<i32>} : memref<8x128xf32, #tpu.memory_space<vmem>>, vector<8x128xf32>,
    return
  }
}

</mosaic_0001>

<llo_original>
// kernel: model_forward.1
$region0: #{model_forward.1}
  #allocation0 [shape = 'u32[]', space=smem, size = 0x4, offset = 0x4, fixed_abs, tag = 'smem constant byte address 0x4 - core index']
  #allocation1 [shape = 'u32[72,128]{1,0:T(1,128)}', space=vmem, size = 0x9000, scoped, tag = 'internal scratch']
  %s0 = inlined_call_operand.vmem [shape: bf16[8,512], index: 0, kind: input, shape index: {}]
  %s1 = inlined_call_operand.vmem [shape: bf16[64,128], index: 1, kind: input, shape index: {}]
  %s2 = inlined_call_operand.vmem [shape: bf16[3,128,128], index: 2, kind: input, shape index: {}]
  %s3 = inlined_call_operand.vmem [shape: f32[3,1,128], index: 3, kind: input, shape index: {}]
  %s4 = inlined_call_operand.vmem [shape: f32[3,128,128], index: 4, kind: input, shape index: {}]
  %s5 = inlined_call_operand.vmem [shape: f32[1,128], index: 5, kind: input, shape index: {}]
  %s6 = inlined_call_operand.vmem [shape: bf16[512,128], index: 6, kind: input, shape index: {}]
  %s7 = inlined_call_operand.vmem [shape: f32[1,128], index: 7, kind: input, shape index: {}]
  %s8 = inlined_call_operand.vmem [shape: bf16[128,128], index: 8, kind: input, shape index: {}]
  %s9 = inlined_call_operand.vmem [shape: f32[1,128], index: 9, kind: input, shape index: {}]
  %s10 = inlined_call_operand.vmem [shape: bf16[128,128], index: 10, kind: input, shape index: {}]
  %s11 = inlined_call_operand.vmem [shape: f32[1,128], index: 11, kind: input, shape index: {}]
  %s12 = inlined_call_operand.vmem [shape: f32[8,128], index: 12, kind: output, shape index: {}]
  %s13 = sld [smem:[#allocation0]]
  $region58: #{model_forward.1} parent=0
    _
  %s15 = ssub.s32 1, %s13
  %s16 = scalar_select 0, %s15, %s13
  // Predicated region
  $region2: #{model_forward.1} parent=0 // pred_check
    _
  $region3: #{model_forward.1} parent=0 // pred_check_branch
    %18 = sbr.rel (0) target = $region5
  $region4: #{model_forward.1} parent=0 // pred_region
    _
  $region5: #{model_forward.1} parent=0 // pred_fallthru
    _
  // Predicated region
  $region6: #{model_forward.1} parent=0 // pred_check
    _
  $region7: #{model_forward.1} parent=0 // pred_check_branch
    %20 = sbr.rel (0) target = $region9
  $region8: #{model_forward.1} parent=0 // pred_region
    _
  $region9: #{model_forward.1} parent=0 // pred_fallthru
    _
  // Predicated region
  $region10: #{model_forward.1} parent=0 // pred_check
    _
  $region11: #{model_forward.1} parent=0 // pred_check_branch
    %22 = sbr.rel (0) target = $region13
  $region12: #{model_forward.1} parent=0 // pred_region
    _
  $region13: #{model_forward.1} parent=0 // pred_fallthru
    _
  // Predicated region
  $region14: #{model_forward.1} parent=0 // pred_check
    _
  $region15: #{model_forward.1} parent=0 // pred_check_branch
    %24 = sbr.rel (0) target = $region17
  $region16: #{model_forward.1} parent=0 // pred_region
    _
  $region17: #{model_forward.1} parent=0 // pred_fallthru
    _
  // Predicated region
  $region18: #{model_forward.1} parent=0 // pred_check
    _
  $region19: #{model_forward.1} parent=0 // pred_check_branch
    %26 = sbr.rel (0) target = $region21
  $region20: #{model_forward.1} parent=0 // pred_region
    _
  $region21: #{model_forward.1} parent=0 // pred_fallthru
    _
  // Predicated region
  $region22: #{model_forward.1} parent=0 // pred_check
    _
  $region23: #{model_forward.1} parent=0 // pred_check_branch
    %28 = sbr.rel (0) target = $region25
  $region24: #{model_forward.1} parent=0 // pred_region
    _
  $region25: #{model_forward.1} parent=0 // pred_fallthru
    _
  // Predicated region
  $region26: #{model_forward.1} parent=0 // pred_check
    _
  $region27: #{model_forward.1} parent=0 // pred_check_branch
    %30 = sbr.rel (0) target = $region29
  $region28: #{model_forward.1} parent=0 // pred_region
    _
  $region29: #{model_forward.1} parent=0 // pred_fallthru
    _
  // Predicated region
  $region30: #{model_forward.1} parent=0 // pred_check
    _
  $region31: #{model_forward.1} parent=0 // pred_check_branch
    %32 = sbr.rel (0) target = $region33
  $region32: #{model_forward.1} parent=0 // pred_region
    _
  $region33: #{model_forward.1} parent=0 // pred_fallthru
    _
  // Predicated region
  $region34: #{model_forward.1} parent=0 // pred_check
    _
  $region35: #{model_forward.1} parent=0 // pred_check_branch
    %34 = sbr.rel (0) target = $region37
  $region36: #{model_forward.1} parent=0 // pred_region
    _
  $region37: #{model_forward.1} parent=0 // pred_fallthru
    _
  // Predicated region
  $region38: #{model_forward.1} parent=0 // pred_check
    _
  $region39: #{model_forward.1} parent=0 // pred_check_branch
    %36 = sbr.rel (0) target = $region41
  $region40: #{model_forward.1} parent=0 // pred_region
    _
  $region41: #{model_forward.1} parent=0 // pred_fallthru
    _
  // Predicated region
  $region42: #{model_forward.1} parent=0 // pred_check
    _
  $region43: #{model_forward.1} parent=0 // pred_check_branch
    %38 = sbr.rel (0) target = $region45
  $region44: #{model_forward.1} parent=0 // pred_region
    _
  $region45: #{model_forward.1} parent=0 // pred_fallthru
    _
  // Predicated region
  $region46: #{model_forward.1} parent=0 // pred_check
    _
  $region47: #{model_forward.1} parent=0 // pred_check_branch
    %40 = sbr.rel (0) target = $region49
  $region48: #{model_forward.1} parent=0 // pred_region
    _
  $region49: #{model_forward.1} parent=0 // pred_fallthru
    _
  %v41 = vld [vmem:[%s0] sm:$0xff]
  %v42 = vld [vmem:[%s0 + $0x8] sm:$0xff]
  %v43 = vld [vmem:[%s6] sm:$0xf]
  %v44 = vld [vmem:[%s6 + $0x4] sm:$0xf]
  %v45 = vld [vmem:[%s6 + $0x8] sm:$0xf]
  %v46 = vld [vmem:[%s6 + $0xc] sm:$0xf]
  %v47 = vld [vmem:[%s6 + $0x10] sm:$0xf]
  %v48 = vld [vmem:[%s6 + $0x14] sm:$0xf]
  %v49 = vld [vmem:[%s6 + $0x18] sm:$0xf]
  %v50 = vld [vmem:[%s6 + $0x1c] sm:$0xf]
  %v51 = vld [vmem:[%s6 + $0x20] sm:$0xf]
  %v52 = vld [vmem:[%s6 + $0x24] sm:$0xf]
  %v53 = vld [vmem:[%s6 + $0x28] sm:$0xf]
  %v54 = vld [vmem:[%s6 + $0x2c] sm:$0xf]
  %v55 = vld [vmem:[%s6 + $0x30] sm:$0xf]
  %v56 = vld [vmem:[%s6 + $0x34] sm:$0xf]
  %v57 = vld [vmem:[%s6 + $0x38] sm:$0xf]
  %v58 = vld [vmem:[%s6 + $0x3c] sm:$0xf]
  %v59 = vld [vmem:[%s6 + $0x40] sm:$0xf]
  %v60 = vld [vmem:[%s6 + $0x44] sm:$0xf]
  %v61 = vld [vmem:[%s6 + $0x48] sm:$0xf]
  %v62 = vld [vmem:[%s6 + $0x4c] sm:$0xf]
  %v63 = vld [vmem:[%s6 + $0x50] sm:$0xf]
  %v64 = vld [vmem:[%s6 + $0x54] sm:$0xf]
  %v65 = vld [vmem:[%s6 + $0x58] sm:$0xf]
  %v66 = vld [vmem:[%s6 + $0x5c] sm:$0xf]
  %v67 = vld [vmem:[%s6 + $0x60] sm:$0xf]
  %v68 = vld [vmem:[%s6 + $0x64] sm:$0xf]
  %v69 = vld [vmem:[%s6 + $0x68] sm:$0xf]
  %v70 = vld [vmem:[%s6 + $0x6c] sm:$0xf]
  %v71 = vld [vmem:[%s6 + $0x70] sm:$0xf]
  %v72 = vld [vmem:[%s6 + $0x74] sm:$0xf]
  %v73 = vld [vmem:[%s6 + $0x78] sm:$0xf]
  %v74 = vld [vmem:[%s6 + $0x7c] sm:$0xf]
  %v75 = vld [vmem:[%s6 + $0x80] sm:$0xf]
  %v76 = vld [vmem:[%s6 + $0x84] sm:$0xf]
  %v77 = vld [vmem:[%s6 + $0x88] sm:$0xf]
  %v78 = vld [vmem:[%s6 + $0x8c] sm:$0xf]
  %v79 = vld [vmem:[%s6 + $0x90] sm:$0xf]
  %v80 = vld [vmem:[%s6 + $0x94] sm:$0xf]
  %v81 = vld [vmem:[%s6 + $0x98] sm:$0xf]
  %v82 = vld [vmem:[%s6 + $0x9c] sm:$0xf]
  %v83 = vld [vmem:[%s6 + $0xa0] sm:$0xf]
  %v84 = vld [vmem:[%s6 + $0xa4] sm:$0xf]
  %v85 = vld [vmem:[%s6 + $0xa8] sm:$0xf]
  %v86 = vld [vmem:[%s6 + $0xac] sm:$0xf]
  %v87 = vld [vmem:[%s6 + $0xb0] sm:$0xf]
  %v88 = vld [vmem:[%s6 + $0xb4] sm:$0xf]
  %v89 = vld [vmem:[%s6 + $0xb8] sm:$0xf]
  %v90 = vld [vmem:[%s6 + $0xbc] sm:$0xf]
  %v91 = vld [vmem:[%s6 + $0xc0] sm:$0xf]
  %v92 = vld [vmem:[%s6 + $0xc4] sm:$0xf]
  %v93 = vld [vmem:[%s6 + $0xc8] sm:$0xf]
  %v94 = vld [vmem:[%s6 + $0xcc] sm:$0xf]
  %v95 = vld [vmem:[%s6 + $0xd0] sm:$0xf]
  %v96 = vld [vmem:[%s6 + $0xd4] sm:$0xf]
  %v97 = vld [vmem:[%s6 + $0xd8] sm:$0xf]
  %v98 = vld [vmem:[%s6 + $0xdc] sm:$0xf]
  %v99 = vld [vmem:[%s6 + $0xe0] sm:$0xf]
  %v100 = vld [vmem:[%s6 + $0xe4] sm:$0xf]
  %v101 = vld [vmem:[%s6 + $0xe8] sm:$0xf]
  %v102 = vld [vmem:[%s6 + $0xec] sm:$0xf]
  %v103 = vld [vmem:[%s6 + $0xf0] sm:$0xf]
  %v104 = vld [vmem:[%s6 + $0xf4] sm:$0xf]
  %v105 = vld [vmem:[%s6 + $0xf8] sm:$0xf]
  %v106 = vld [vmem:[%s6 + $0xfc] sm:$0xf]
  %v107 = vld [vmem:[%s7] sm:$0x1]
  %v109 = vperm.slane %v107, 0
  %v113 = vunpack.c.l.b16 %v41
  %v114 = vunpack.c.h.b16 %v41
  %v115 = vunpack.c.l.b16 %v42
  %v116 = vunpack.c.h.b16 %v42
  %v117 = vpack.c.b16 %v113, %v113
  %v118 = vpack.c.b16 %v114, %v114
  %v119 = vpack.c.b16 %v115, %v115
  %v120 = vpack.c.b16 %v116, %v116
  %v189 = vunpack.c.l.b16 %v43
  %v190 = vunpack.c.l.b16 %v44
  %v191 = vunpack.c.l.b16 %v45
  %v192 = vunpack.c.l.b16 %v46
  %v193 = vunpack.c.l.b16 %v47
  %v194 = vunpack.c.l.b16 %v48
  %v195 = vunpack.c.l.b16 %v49
  %v196 = vunpack.c.l.b16 %v50
  %v197 = vunpack.c.l.b16 %v51
  %v198 = vunpack.c.l.b16 %v52
  %v199 = vunpack.c.l.b16 %v53
  %v200 = vunpack.c.l.b16 %v54
  %v201 = vunpack.c.l.b16 %v55
  %v202 = vunpack.c.l.b16 %v56
  %v203 = vunpack.c.l.b16 %v57
  %v204 = vunpack.c.l.b16 %v58
  %v205 = vunpack.c.l.b16 %v59
  %v206 = vunpack.c.l.b16 %v60
  %v207 = vunpack.c.l.b16 %v61
  %v208 = vunpack.c.l.b16 %v62
  %v209 = vunpack.c.l.b16 %v63
  %v210 = vunpack.c.l.b16 %v64
  %v211 = vunpack.c.l.b16 %v65
  %v212 = vunpack.c.l.b16 %v66
  %v213 = vunpack.c.l.b16 %v67
  %v214 = vunpack.c.l.b16 %v68
  %v215 = vunpack.c.l.b16 %v69
  %v216 = vunpack.c.l.b16 %v70
  %v217 = vunpack.c.l.b16 %v71
  %v218 = vunpack.c.l.b16 %v72
  %v219 = vunpack.c.l.b16 %v73
  %v220 = vunpack.c.l.b16 %v74
  %v221 = vunpack.c.l.b16 %v75
  %v222 = vunpack.c.l.b16 %v76
  %v223 = vunpack.c.l.b16 %v77
  %v224 = vunpack.c.l.b16 %v78
  %v225 = vunpack.c.l.b16 %v79
  %v226 = vunpack.c.l.b16 %v80
  %v227 = vunpack.c.l.b16 %v81
  %v228 = vunpack.c.l.b16 %v82
  %v229 = vunpack.c.l.b16 %v83
  %v230 = vunpack.c.l.b16 %v84
  %v231 = vunpack.c.l.b16 %v85
  %v232 = vunpack.c.l.b16 %v86
  %v233 = vunpack.c.l.b16 %v87
  %v234 = vunpack.c.l.b16 %v88
  %v235 = vunpack.c.l.b16 %v89
  %v236 = vunpack.c.l.b16 %v90
  %v237 = vunpack.c.l.b16 %v91
  %v238 = vunpack.c.l.b16 %v92
  %v239 = vunpack.c.l.b16 %v93
  %v240 = vunpack.c.l.b16 %v94
  %v241 = vunpack.c.l.b16 %v95
  %v242 = vunpack.c.l.b16 %v96
  %v243 = vunpack.c.l.b16 %v97
  %v244 = vunpack.c.l.b16 %v98
  %v245 = vunpack.c.l.b16 %v99
  %v246 = vunpack.c.l.b16 %v100
  %v247 = vunpack.c.l.b16 %v101
  %v248 = vunpack.c.l.b16 %v102
  %v249 = vunpack.c.l.b16 %v103
  %v250 = vunpack.c.l.b16 %v104
  %v251 = vunpack.c.l.b16 %v105
  %v252 = vunpack.c.l.b16 %v106
  %v253 = vpack.c.b16 %v190, %v189
  %v254 = vpack.c.b16 %v192, %v191
  %v255 = vpack.c.b16 %v194, %v193
  %v256 = vpack.c.b16 %v196, %v195
  %v257 = vpack.c.b16 %v198, %v197
  %v258 = vpack.c.b16 %v200, %v199
  %v259 = vpack.c.b16 %v202, %v201
  %v260 = vpack.c.b16 %v204, %v203
  %v261 = vpack.c.b16 %v206, %v205
  %v262 = vpack.c.b16 %v208, %v207
  %v263 = vpack.c.b16 %v210, %v209
  %v264 = vpack.c.b16 %v212, %v211
  %v265 = vpack.c.b16 %v214, %v213
  %v266 = vpack.c.b16 %v216, %v215
  %v267 = vpack.c.b16 %v218, %v217
  %v268 = vpack.c.b16 %v220, %v219
  %v269 = vpack.c.b16 %v222, %v221
  %v270 = vpack.c.b16 %v224, %v223
  %v271 = vpack.c.b16 %v226, %v225
  %v272 = vpack.c.b16 %v228, %v227
  %v273 = vpack.c.b16 %v230, %v229
  %v274 = vpack.c.b16 %v232, %v231
  %v275 = vpack.c.b16 %v234, %v233
  %v276 = vpack.c.b16 %v236, %v235
  %v277 = vpack.c.b16 %v238, %v237
  %v278 = vpack.c.b16 %v240, %v239
  %v279 = vpack.c.b16 %v242, %v241
  %v280 = vpack.c.b16 %v244, %v243
  %v281 = vpack.c.b16 %v246, %v245
  %v282 = vpack.c.b16 %v248, %v247
  %v283 = vpack.c.b16 %v250, %v249
  %v284 = vpack.c.b16 %v252, %v251
  %317 = vmatpush.bf16.msra.mxu0 %v260
  %318 = vmatpush.bf16.msra.mxu0 %v259
  %319 = vmatpush.bf16.msra.mxu0 %v258
  %320 = vmatpush.bf16.msra.mxu0 %v257
  %321 = vmatpush.bf16.msra.mxu0 %v256
  %322 = vmatpush.bf16.msra.mxu0 %v255
  %323 = vmatpush.bf16.msra.mxu0 %v254
  %324 = vmatpush.bf16.msra.mxu0 %v253
  %325 = vmatmul.bf16.gmra.mxu0 %v117
  %v326 = vpop.f32.mrf.mxu0
  %v327 = vadd.f32 %v109, %v326
  %v328 = vpop.f32.mrf.mxu0
  %329 = vdwg.mxu0
  %330 = vmatpush.bf16.msra.mxu0 %v268
  %331 = vmatpush.bf16.msra.mxu0 %v267
  %332 = vmatpush.bf16.msra.mxu0 %v266
  %333 = vmatpush.bf16.msra.mxu0 %v265
  %334 = vmatpush.bf16.msra.mxu0 %v264
  %335 = vmatpush.bf16.msra.mxu0 %v263
  %336 = vmatpush.bf16.msra.mxu0 %v262
  %337 = vmatpush.bf16.msra.mxu0 %v261
  %338 = vmatmul.bf16.gmra.mxu0 %v118
  %v339 = vpop.f32.mrf.mxu0
  %v340 = vadd.f32 %v327, %v339
  %v341 = vpop.f32.mrf.mxu0
  %342 = vdwg.mxu0
  %343 = vmatpush.bf16.msra.mxu0 %v276
  %344 = vmatpush.bf16.msra.mxu0 %v275
  %345 = vmatpush.bf16.msra.mxu0 %v274
  %346 = vmatpush.bf16.msra.mxu0 %v273
  %347 = vmatpush.bf16.msra.mxu0 %v272
  %348 = vmatpush.bf16.msra.mxu0 %v271
  %349 = vmatpush.bf16.msra.mxu0 %v270
  %350 = vmatpush.bf16.msra.mxu0 %v269
  %351 = vmatmul.bf16.gmra.mxu0 %v119
  %v352 = vpop.f32.mrf.mxu0
  %v353 = vadd.f32 %v340, %v352
  %v354 = vpop.f32.mrf.mxu0
  %355 = vdwg.mxu0
  %356 = vmatpush.bf16.msra.mxu0 %v284
  %357 = vmatpush.bf16.msra.mxu0 %v283
  %358 = vmatpush.bf16.msra.mxu0 %v282
  %359 = vmatpush.bf16.msra.mxu0 %v281
  %360 = vmatpush.bf16.msra.mxu0 %v280
  %361 = vmatpush.bf16.msra.mxu0 %v279
  %362 = vmatpush.bf16.msra.mxu0 %v278
  %363 = vmatpush.bf16.msra.mxu0 %v277
  %364 = vmatmul.bf16.gmra.mxu0 %v120
  %v365 = vpop.f32.mrf.mxu0
  %v366 = vadd.f32 %v353, %v365
  %v367 = vpop.f32.mrf.mxu0
  %368 = vdwg.mxu0
  %v369 = vld [vmem:[%s1] sm:$0xf]
  %v370 = vld [vmem:[%s1 + $0x4] sm:$0xf]
  %v371 = vld [vmem:[%s1 + $0x8] sm:$0xf]
  %v372 = vld [vmem:[%s1 + $0xc] sm:$0xf]
  %v373 = vld [vmem:[%s1 + $0x10] sm:$0xf]
  %v374 = vld [vmem:[%s1 + $0x14] sm:$0xf]
  %v375 = vld [vmem:[%s1 + $0x18] sm:$0xf]
  %v376 = vld [vmem:[%s1 + $0x1c] sm:$0xf]
  %v377 = vld [vmem:[%s2] sm:$0xf]
  %v378 = vld [vmem:[%s2 + $0x4] sm:$0xf]
  %v379 = vld [vmem:[%s2 + $0x8] sm:$0xf]
  %v380 = vld [vmem:[%s2 + $0xc] sm:$0xf]
  %v381 = vld [vmem:[%s2 + $0x10] sm:$0xf]
  %v382 = vld [vmem:[%s2 + $0x14] sm:$0xf]
  %v383 = vld [vmem:[%s2 + $0x18] sm:$0xf]
  %v384 = vld [vmem:[%s2 + $0x1c] sm:$0xf]
  %v385 = vld [vmem:[%s2 + $0x20] sm:$0xf]
  %v386 = vld [vmem:[%s2 + $0x24] sm:$0xf]
  %v387 = vld [vmem:[%s2 + $0x28] sm:$0xf]
  %v388 = vld [vmem:[%s2 + $0x2c] sm:$0xf]
  %v389 = vld [vmem:[%s2 + $0x30] sm:$0xf]
  %v390 = vld [vmem:[%s2 + $0x34] sm:$0xf]
  %v391 = vld [vmem:[%s2 + $0x38] sm:$0xf]
  %v392 = vld [vmem:[%s2 + $0x3c] sm:$0xf]
  %v393 = vld [vmem:[%s3] sm:$0x1]
  %v395 = vperm.slane %v393, 0
  %v405 = vunpack.c.l.b16 %v369
  %v406 = vunpack.c.l.b16 %v370
  %v407 = vunpack.c.l.b16 %v371
  %v408 = vunpack.c.l.b16 %v372
  %v409 = vunpack.c.l.b16 %v373
  %v410 = vunpack.c.l.b16 %v374
  %v411 = vunpack.c.l.b16 %v375
  %v412 = vunpack.c.l.b16 %v376
  %v413 = vpack.c.b16 %v406, %v405
  %v414 = vpack.c.b16 %v408, %v407
  %v415 = vpack.c.b16 %v410, %v409
  %v416 = vpack.c.b16 %v412, %v411
  %v437 = vunpack.c.l.b16 %v377
  %v438 = vunpack.c.l.b16 %v378
  %v439 = vunpack.c.l.b16 %v379
  %v440 = vunpack.c.l.b16 %v380
  %v441 = vunpack.c.l.b16 %v381
  %v442 = vunpack.c.l.b16 %v382
  %v443 = vunpack.c.l.b16 %v383
  %v444 = vunpack.c.l.b16 %v384
  %v445 = vunpack.c.l.b16 %v385
  %v446 = vunpack.c.l.b16 %v386
  %v447 = vunpack.c.l.b16 %v387
  %v448 = vunpack.c.l.b16 %v388
  %v449 = vunpack.c.l.b16 %v389
  %v450 = vunpack.c.l.b16 %v390
  %v451 = vunpack.c.l.b16 %v391
  %v452 = vunpack.c.l.b16 %v392
  %v453 = vpack.c.b16 %v438, %v437
  %v454 = vpack.c.b16 %v440, %v439
  %v455 = vpack.c.b16 %v442, %v441
  %v456 = vpack.c.b16 %v444, %v443
  %v457 = vpack.c.b16 %v446, %v445
  %v458 = vpack.c.b16 %v448, %v447
  %v459 = vpack.c.b16 %v450, %v449
  %v460 = vpack.c.b16 %v452, %v451
  %469 = vmatpush.bf16.msra.mxu0 %v460
  %470 = vmatpush.bf16.msra.mxu0 %v459
  %471 = vmatpush.bf16.msra.mxu0 %v458
  %472 = vmatpush.bf16.msra.mxu0 %v457
  %473 = vmatpush.bf16.msra.mxu0 %v456
  %474 = vmatpush.bf16.msra.mxu0 %v455
  %475 = vmatpush.bf16.msra.mxu0 %v454
  %476 = vmatpush.bf16.msra.mxu0 %v453
  %477 = vmatmul.bf16.gmra.mxu0 %v413
  %v478 = vpop.f32.mrf.mxu0
  %v479 = vadd.f32 %v395, %v478
  %v480 = vpop.f32.mrf.mxu0
  %v481 = vadd.f32 %v395, %v480
  %482 = vmatmul.bf16.gmra.mxu0 %v414
  %v483 = vpop.f32.mrf.mxu0
  %v484 = vadd.f32 %v395, %v483
  %v485 = vpop.f32.mrf.mxu0
  %v486 = vadd.f32 %v395, %v485
  %487 = vmatmul.bf16.gmra.mxu0 %v415
  %v488 = vpop.f32.mrf.mxu0
  %v489 = vadd.f32 %v395, %v488
  %v490 = vpop.f32.mrf.mxu0
  %v491 = vadd.f32 %v395, %v490
  %492 = vmatmul.bf16.gmra.mxu0 %v416
  %v493 = vpop.f32.mrf.mxu0
  %v494 = vadd.f32 %v395, %v493
  %v495 = vpop.f32.mrf.mxu0
  %v496 = vadd.f32 %v395, %v495
  %497 = vdwg.mxu0
  %s498 = scalar_lea.vmem %s2, 64
  %v499 = vld [vmem:[%s498] sm:$0xf]
  %v500 = vld [vmem:[%s498 + $0x4] sm:$0xf]
  %v501 = vld [vmem:[%s498 + $0x8] sm:$0xf]
  %v502 = vld [vmem:[%s498 + $0xc] sm:$0xf]
  %v503 = vld [vmem:[%s498 + $0x10] sm:$0xf]
  %v504 = vld [vmem:[%s498 + $0x14] sm:$0xf]
  %v505 = vld [vmem:[%s498 + $0x18] sm:$0xf]
  %v506 = vld [vmem:[%s498 + $0x1c] sm:$0xf]
  %v507 = vld [vmem:[%s498 + $0x20] sm:$0xf]
  %v508 = vld [vmem:[%s498 + $0x24] sm:$0xf]
  %v509 = vld [vmem:[%s498 + $0x28] sm:$0xf]
  %v510 = vld [vmem:[%s498 + $0x2c] sm:$0xf]
  %v511 = vld [vmem:[%s498 + $0x30] sm:$0xf]
  %v512 = vld [vmem:[%s498 + $0x34] sm:$0xf]
  %v513 = vld [vmem:[%s498 + $0x38] sm:$0xf]
  %v514 = vld [vmem:[%s498 + $0x3c] sm:$0xf]
  %s515 = scalar_lea.vmem %s3, 1
  %v516 = vld [vmem:[%s515] sm:$0x1]
  %v518 = vperm.slane %v516, 0
  %v536 = vunpack.c.l.b16 %v499
  %v537 = vunpack.c.l.b16 %v500
  %v538 = vunpack.c.l.b16 %v501
  %v539 = vunpack.c.l.b16 %v502
  %v540 = vunpack.c.l.b16 %v503
  %v541 = vunpack.c.l.b16 %v504
  %v542 = vunpack.c.l.b16 %v505
  %v543 = vunpack.c.l.b16 %v506
  %v544 = vunpack.c.l.b16 %v507
  %v545 = vunpack.c.l.b16 %v508
  %v546 = vunpack.c.l.b16 %v509
  %v547 = vunpack.c.l.b16 %v510
  %v548 = vunpack.c.l.b16 %v511
  %v549 = vunpack.c.l.b16 %v512
  %v550 = vunpack.c.l.b16 %v513
  %v551 = vunpack.c.l.b16 %v514
  %v552 = vpack.c.b16 %v537, %v536
  %v553 = vpack.c.b16 %v539, %v538
  %v554 = vpack.c.b16 %v541, %v540
  %v555 = vpack.c.b16 %v543, %v542
  %v556 = vpack.c.b16 %v545, %v544
  %v557 = vpack.c.b16 %v547, %v546
  %v558 = vpack.c.b16 %v549, %v548
  %v559 = vpack.c.b16 %v551, %v550
  %568 = vmatpush.bf16.msra.mxu0 %v559
  %569 = vmatpush.bf16.msra.mxu0 %v558
  %570 = vmatpush.bf16.msra.mxu0 %v557
  %571 = vmatpush.bf16.msra.mxu0 %v556
  %572 = vmatpush.bf16.msra.mxu0 %v555
  %573 = vmatpush.bf16.msra.mxu0 %v554
  %574 = vmatpush.bf16.msra.mxu0 %v553
  %575 = vmatpush.bf16.msra.mxu0 %v552
  %576 = vmatmul.bf16.gmra.mxu0 %v413
  %v577 = vpop.f32.mrf.mxu0
  %v578 = vadd.f32 %v518, %v577
  %v579 = vpop.f32.mrf.mxu0
  %v580 = vadd.f32 %v518, %v579
  %581 = vmatmul.bf16.gmra.mxu0 %v414
  %v582 = vpop.f32.mrf.mxu0
  %v583 = vadd.f32 %v518, %v582
  %v584 = vpop.f32.mrf.mxu0
  %v585 = vadd.f32 %v518, %v584
  %586 = vmatmul.bf16.gmra.mxu0 %v415
  %v587 = vpop.f32.mrf.mxu0
  %v588 = vadd.f32 %v518, %v587
  %v589 = vpop.f32.mrf.mxu0
  %v590 = vadd.f32 %v518, %v589
  %591 = vmatmul.bf16.gmra.mxu0 %v416
  %v592 = vpop.f32.mrf.mxu0
  %v593 = vadd.f32 %v518, %v592
  %v594 = vpop.f32.mrf.mxu0
  %v595 = vadd.f32 %v518, %v594
  %596 = vdwg.mxu0
  %s597 = scalar_lea.vmem %s2, 128
  %v598 = vld [vmem:[%s597] sm:$0xf]
  %v599 = vld [vmem:[%s597 + $0x4] sm:$0xf]
  %v600 = vld [vmem:[%s597 + $0x8] sm:$0xf]
  %v601 = vld [vmem:[%s597 + $0xc] sm:$0xf]
  %v602 = vld [vmem:[%s597 + $0x10] sm:$0xf]
  %v603 = vld [vmem:[%s597 + $0x14] sm:$0xf]
  %v604 = vld [vmem:[%s597 + $0x18] sm:$0xf]
  %v605 = vld [vmem:[%s597 + $0x1c] sm:$0xf]
  %v606 = vld [vmem:[%s597 + $0x20] sm:$0xf]
  %v607 = vld [vmem:[%s597 + $0x24] sm:$0xf]
  %v608 = vld [vmem:[%s597 + $0x28] sm:$0xf]
  %v609 = vld [vmem:[%s597 + $0x2c] sm:$0xf]
  %v610 = vld [vmem:[%s597 + $0x30] sm:$0xf]
  %v611 = vld [vmem:[%s597 + $0x34] sm:$0xf]
  %v612 = vld [vmem:[%s597 + $0x38] sm:$0xf]
  %v613 = vld [vmem:[%s597 + $0x3c] sm:$0xf]
  %s614 = scalar_lea.vmem %s3, 2
  %v615 = vld [vmem:[%s614] sm:$0x1]
  %v617 = vperm.slane %v615, 0
  %v635 = vunpack.c.l.b16 %v598
  %v636 = vunpack.c.l.b16 %v599
  %v637 = vunpack.c.l.b16 %v600
  %v638 = vunpack.c.l.b16 %v601
  %v639 = vunpack.c.l.b16 %v602
  %v640 = vunpack.c.l.b16 %v603
  %v641 = vunpack.c.l.b16 %v604
  %v642 = vunpack.c.l.b16 %v605
  %v643 = vunpack.c.l.b16 %v606
  %v644 = vunpack.c.l.b16 %v607
  %v645 = vunpack.c.l.b16 %v608
  %v646 = vunpack.c.l.b16 %v609
  %v647 = vunpack.c.l.b16 %v610
  %v648 = vunpack.c.l.b16 %v611
  %v649 = vunpack.c.l.b16 %v612
  %v650 = vunpack.c.l.b16 %v613
  %v651 = vpack.c.b16 %v636, %v635
  %v652 = vpack.c.b16 %v638, %v637
  %v653 = vpack.c.b16 %v640, %v639
  %v654 = vpack.c.b16 %v642, %v641
  %v655 = vpack.c.b16 %v644, %v643
  %v656 = vpack.c.b16 %v646, %v645
  %v657 = vpack.c.b16 %v648, %v647
  %v658 = vpack.c.b16 %v650, %v649
  %667 = vmatpush.bf16.msra.mxu0 %v658
  %668 = vmatpush.bf16.msra.mxu0 %v657
  %669 = vmatpush.bf16.msra.mxu0 %v656
  %670 = vmatpush.bf16.msra.mxu0 %v655
  %671 = vmatpush.bf16.msra.mxu0 %v654
  %672 = vmatpush.bf16.msra.mxu0 %v653
  %673 = vmatpush.bf16.msra.mxu0 %v652
  %674 = vmatpush.bf16.msra.mxu0 %v651
  %675 = vmatmul.bf16.gmra.mxu0 %v413
  %v676 = vpop.f32.mrf.mxu0
  %v677 = vadd.f32 %v617, %v676
  %v678 = vpop.f32.mrf.mxu0
  %v679 = vadd.f32 %v617, %v678
  %680 = vmatmul.bf16.gmra.mxu0 %v414
  %v681 = vpop.f32.mrf.mxu0
  %v682 = vadd.f32 %v617, %v681
  %v683 = vpop.f32.mrf.mxu0
  %v684 = vadd.f32 %v617, %v683
  %685 = vmatmul.bf16.gmra.mxu0 %v415
  %v686 = vpop.f32.mrf.mxu0
  %v687 = vadd.f32 %v617, %v686
  %v688 = vpop.f32.mrf.mxu0
  %v689 = vadd.f32 %v617, %v688
  %690 = vmatmul.bf16.gmra.mxu0 %v416
  %v691 = vpop.f32.mrf.mxu0
  %v692 = vadd.f32 %v617, %v691
  %v693 = vpop.f32.mrf.mxu0
  %v694 = vadd.f32 %v617, %v693
  %695 = vdwg.mxu0
  %v696 = vld [vmem:[%s4] sm:$0xff]
  %v697 = vld [vmem:[%s4 + $0x8] sm:$0xff]
  %v698 = vld [vmem:[%s4 + $0x10] sm:$0xff]
  %v699 = vld [vmem:[%s4 + $0x18] sm:$0xff]
  %v700 = vld [vmem:[%s4 + $0x20] sm:$0xff]
  %v701 = vld [vmem:[%s4 + $0x28] sm:$0xff]
  %v702 = vld [vmem:[%s4 + $0x30] sm:$0xff]
  %v703 = vld [vmem:[%s4 + $0x38] sm:$0xff]
  %v704 = vld [vmem:[%s4 + $0x40] sm:$0xff]
  %v705 = vld [vmem:[%s4 + $0x48] sm:$0xff]
  %v706 = vld [vmem:[%s4 + $0x50] sm:$0xff]
  %v707 = vld [vmem:[%s4 + $0x58] sm:$0xff]
  %v708 = vld [vmem:[%s4 + $0x60] sm:$0xff]
  %v709 = vld [vmem:[%s4 + $0x68] sm:$0xff]
  %v710 = vld [vmem:[%s4 + $0x70] sm:$0xff]
  %v711 = vld [vmem:[%s4 + $0x78] sm:$0xff]
  %s712 = scalar_lea.vmem %s4, 128
  %v713 = vld [vmem:[%s712] sm:$0xff]
  %v714 = vld [vmem:[%s712 + $0x8] sm:$0xff]
  %v715 = vld [vmem:[%s712 + $0x10] sm:$0xff]
  %v716 = vld [vmem:[%s712 + $0x18] sm:$0xff]
  %v717 = vld [vmem:[%s712 + $0x20] sm:$0xff]
  %v718 = vld [vmem:[%s712 + $0x28] sm:$0xff]
  %v719 = vld [vmem:[%s712 + $0x30] sm:$0xff]
  %v720 = vld [vmem:[%s712 + $0x38] sm:$0xff]
  %v721 = vld [vmem:[%s712 + $0x40] sm:$0xff]
  %v722 = vld [vmem:[%s712 + $0x48] sm:$0xff]
  %v723 = vld [vmem:[%s712 + $0x50] sm:$0xff]
  %v724 = vld [vmem:[%s712 + $0x58] sm:$0xff]
  %v725 = vld [vmem:[%s712 + $0x60] sm:$0xff]
  %v726 = vld [vmem:[%s712 + $0x68] sm:$0xff]
  %v727 = vld [vmem:[%s712 + $0x70] sm:$0xff]
  %v728 = vld [vmem:[%s712 + $0x78] sm:$0xff]
  %s729 = scalar_lea.vmem %s4, 256
  %v730 = vld [vmem:[%s729] sm:$0xff]
  %v731 = vld [vmem:[%s729 + $0x8] sm:$0xff]
  %v732 = vld [vmem:[%s729 + $0x10] sm:$0xff]
  %v733 = vld [vmem:[%s729 + $0x18] sm:$0xff]
  %v734 = vld [vmem:[%s729 + $0x20] sm:$0xff]
  %v735 = vld [vmem:[%s729 + $0x28] sm:$0xff]
  %v736 = vld [vmem:[%s729 + $0x30] sm:$0xff]
  %v737 = vld [vmem:[%s729 + $0x38] sm:$0xff]
  %v738 = vld [vmem:[%s729 + $0x40] sm:$0xff]
  %v739 = vld [vmem:[%s729 + $0x48] sm:$0xff]
  %v740 = vld [vmem:[%s729 + $0x50] sm:$0xff]
  %v741 = vld [vmem:[%s729 + $0x58] sm:$0xff]
  %v742 = vld [vmem:[%s729 + $0x60] sm:$0xff]
  %v743 = vld [vmem:[%s729 + $0x68] sm:$0xff]
  %v744 = vld [vmem:[%s729 + $0x70] sm:$0xff]
  %v745 = vld [vmem:[%s729 + $0x78] sm:$0xff]
  %v746 = vld [vmem:[%s5] sm:$0x1]
  %747 = vmatpush.msra.mxu0 %v711
  %748 = vmatpush.msra.mxu0 %v710
  %749 = vmatpush.msra.mxu0 %v709
  %750 = vmatpush.msra.mxu0 %v708
  %751 = vmatpush.msra.mxu0 %v707
  %752 = vmatpush.msra.mxu0 %v706
  %753 = vmatpush.msra.mxu0 %v705
  %754 = vmatpush.msra.mxu0 %v704
  %755 = vmatpush.msra.mxu0 %v703
  %756 = vmatpush.msra.mxu0 %v702
  %757 = vmatpush.msra.mxu0 %v701
  %758 = vmatpush.msra.mxu0 %v700
  %759 = vmatpush.msra.mxu0 %v699
  %760 = vmatpush.msra.mxu0 %v698
  %761 = vmatpush.msra.mxu0 %v697
  %762 = vmatpush.msra.mxu0 %v696
  %763 = vmatmul.f32.gmra.mxu0 0.0
  %v764 = vpop.f32.mrf.mxu0
  %v765 = vadd.f32 0.0, %v764
  %766 = vdwg.mxu0
  %767 = vmatpush.msra.mxu0 %v728
  %768 = vmatpush.msra.mxu0 %v727
  %769 = vmatpush.msra.mxu0 %v726
  %770 = vmatpush.msra.mxu0 %v725
  %771 = vmatpush.msra.mxu0 %v724
  %772 = vmatpush.msra.mxu0 %v723
  %773 = vmatpush.msra.mxu0 %v722
  %774 = vmatpush.msra.mxu0 %v721
  %775 = vmatpush.msra.mxu0 %v720
  %776 = vmatpush.msra.mxu0 %v719
  %777 = vmatpush.msra.mxu0 %v718
  %778 = vmatpush.msra.mxu0 %v717
  %779 = vmatpush.msra.mxu0 %v716
  %780 = vmatpush.msra.mxu0 %v715
  %781 = vmatpush.msra.mxu0 %v714
  %782 = vmatpush.msra.mxu0 %v713
  %783 = vmatmul.f32.gmra.mxu0 0.0
  %v784 = vpop.f32.mrf.mxu0
  %v785 = vadd.f32 0.0, %v784
  %786 = vdwg.mxu0
  %v788 = vperm.slane %v746, 0
  %790 = vmatpush.msra.mxu0 %v745
  %791 = vmatpush.msra.mxu0 %v744
  %792 = vmatpush.msra.mxu0 %v743
  %793 = vmatpush.msra.mxu0 %v742
  %794 = vmatpush.msra.mxu0 %v741
  %795 = vmatpush.msra.mxu0 %v740
  %796 = vmatpush.msra.mxu0 %v739
  %797 = vmatpush.msra.mxu0 %v738
  %798 = vmatpush.msra.mxu0 %v737
  %799 = vmatpush.msra.mxu0 %v736
  %800 = vmatpush.msra.mxu0 %v735
  %801 = vmatpush.msra.mxu0 %v734
  %802 = vmatpush.msra.mxu0 %v733
  %803 = vmatpush.msra.mxu0 %v732
  %804 = vmatpush.msra.mxu0 %v731
  %805 = vmatpush.msra.mxu0 %v730
  %806 = vmatmul.f32.gmra.mxu0 0.0
  %v807 = vpop.f32.mrf.mxu0
  %v808 = vadd.f32 %v788, %v807
  %809 = vdwg.mxu0
  %v810 = vadd.f32 %v479, %v765
  %v811 = vxor.u32 %v810, 2147483648
  %v812 = vmul.f32 %v811, 1.442695
  %v813 = vpow.pop %v812
  %v814 = vadd.f32 %v813, 1.0
  %v815 = vrcp.pop %v814
  %v816 = vmul.f32 %v814, %v815
  %v817 = vsub.f32 1.0, %v816
  %v818 = vmul.f32 %v815, %v817
  %v819 = vadd.f32 %v815, %v818
  %vm820 = vweird.f32 %v814
  %vm821 = vweird.f32 %v815
  %vm822 = vmor %vm820, %vm821
  %v823 = vsel %vm822, %v815, %v819
  %v824 = vand.u32 2147483647, %v814
  %vm825 = vcmp.eq.f32.partialorder %v824, 8.507059e+37
  %v826 = vand.u32 %v814, 2147483648
  %v827 = vor.u32 1.1754944e-38, %v826
  %v828 = vsel %vm825, %v827, %v823
  %v829 = vmul.f32 1.0, %v828
  %v830 = vadd.f32 %v578, %v785
  %v831 = vxor.u32 %v830, 2147483648
  %v832 = vmul.f32 %v831, 1.442695
  %v833 = vpow.pop %v832
  %v834 = vadd.f32 %v833, 1.0
  %v835 = vrcp.pop %v834
  %v836 = vmul.f32 %v834, %v835
  %v837 = vsub.f32 1.0, %v836
  %v838 = vmul.f32 %v835, %v837
  %v839 = vadd.f32 %v835, %v838
  %vm840 = vweird.f32 %v834
  %vm841 = vweird.f32 %v835
  %vm842 = vmor %vm840, %vm841
  %v843 = vsel %vm842, %v835, %v839
  %v844 = vand.u32 2147483647, %v834
  %vm845 = vcmp.eq.f32.partialorder %v844, 8.507059e+37
  %v846 = vand.u32 %v834, 2147483648
  %v847 = vor.u32 1.1754944e-38, %v846
  %v848 = vsel %vm845, %v847, %v843
  %v849 = vmul.f32 1.0, %v848
  %v850 = vmul.f32 %v829, %v808
  %v851 = vadd.f32 %v677, %v850
  %v852 = vtanh.pop %v851
  %v853 = vsub.f32 1.0, %v849
  %v854 = vmul.f32 %v853, %v852
  %v855 = vmul.f32 %v849, 0.0
  %v856 = vadd.f32 %v854, %v855
  %857 = vmatpush.msra.mxu0 %v711
  %858 = vmatpush.msra.mxu0 %v710
  %859 = vmatpush.msra.mxu0 %v709
  %860 = vmatpush.msra.mxu0 %v708
  %861 = vmatpush.msra.mxu0 %v707
  %862 = vmatpush.msra.mxu0 %v706
  %863 = vmatpush.msra.mxu0 %v705
  %864 = vmatpush.msra.mxu0 %v704
  %865 = vmatpush.msra.mxu0 %v703
  %866 = vmatpush.msra.mxu0 %v702
  %867 = vmatpush.msra.mxu0 %v701
  %868 = vmatpush.msra.mxu0 %v700
  %869 = vmatpush.msra.mxu0 %v699
  %870 = vmatpush.msra.mxu0 %v698
  %871 = vmatpush.msra.mxu0 %v697
  %872 = vmatpush.msra.mxu0 %v696
  %873 = vmatmul.f32.gmra.mxu0 %v856
  %v874 = vpop.f32.mrf.mxu0
  %v875 = vadd.f32 0.0, %v874
  %876 = vdwg.mxu0
  %877 = vmatpush.msra.mxu0 %v728
  %878 = vmatpush.msra.mxu0 %v727
  %879 = vmatpush.msra.mxu0 %v726
  %880 = vmatpush.msra.mxu0 %v725
  %881 = vmatpush.msra.mxu0 %v724
  %882 = vmatpush.msra.mxu0 %v723
  %883 = vmatpush.msra.mxu0 %v722
  %884 = vmatpush.msra.mxu0 %v721
  %885 = vmatpush.msra.mxu0 %v720
  %886 = vmatpush.msra.mxu0 %v719
  %887 = vmatpush.msra.mxu0 %v718
  %888 = vmatpush.msra.mxu0 %v717
  %889 = vmatpush.msra.mxu0 %v716
  %890 = vmatpush.msra.mxu0 %v715
  %891 = vmatpush.msra.mxu0 %v714
  %892 = vmatpush.msra.mxu0 %v713
  %893 = vmatmul.f32.gmra.mxu0 %v856
  %v894 = vpop.f32.mrf.mxu0
  %v895 = vadd.f32 0.0, %v894
  %896 = vdwg.mxu0
  %897 = vmatpush.msra.mxu0 %v745
  %898 = vmatpush.msra.mxu0 %v744
  %899 = vmatpush.msra.mxu0 %v743
  %900 = vmatpush.msra.mxu0 %v742
  %901 = vmatpush.msra.mxu0 %v741
  %902 = vmatpush.msra.mxu0 %v740
  %903 = vmatpush.msra.mxu0 %v739
  %904 = vmatpush.msra.mxu0 %v738
  %905 = vmatpush.msra.mxu0 %v737
  %906 = vmatpush.msra.mxu0 %v736
  %907 = vmatpush.msra.mxu0 %v735
  %908 = vmatpush.msra.mxu0 %v734
  %909 = vmatpush.msra.mxu0 %v733
  %910 = vmatpush.msra.mxu0 %v732
  %911 = vmatpush.msra.mxu0 %v731
  %912 = vmatpush.msra.mxu0 %v730
  %913 = vmatmul.f32.gmra.mxu0 %v856
  %v914 = vpop.f32.mrf.mxu0
  %v915 = vadd.f32 %v788, %v914
  %916 = vdwg.mxu0
  %v917 = vadd.f32 %v481, %v875
  %v918 = vxor.u32 %v917, 2147483648
  %v919 = vmul.f32 %v918, 1.442695
  %v920 = vpow.pop %v919
  %v921 = vadd.f32 %v920, 1.0
  %v922 = vrcp.pop %v921
  %v923 = vmul.f32 %v921, %v922
  %v924 = vsub.f32 1.0, %v923
  %v925 = vmul.f32 %v922, %v924
  %v926 = vadd.f32 %v922, %v925
  %vm927 = vweird.f32 %v921
  %vm928 = vweird.f32 %v922
  %vm929 = vmor %vm927, %vm928
  %v930 = vsel %vm929, %v922, %v926
  %v931 = vand.u32 2147483647, %v921
  %vm932 = vcmp.eq.f32.partialorder %v931, 8.507059e+37
  %v933 = vand.u32 %v921, 2147483648
  %v934 = vor.u32 1.1754944e-38, %v933
  %v935 = vsel %vm932, %v934, %v930
  %v936 = vmul.f32 1.0, %v935
  %v937 = vadd.f32 %v580, %v895
  %v938 = vxor.u32 %v937, 2147483648
  %v939 = vmul.f32 %v938, 1.442695
  %v940 = vpow.pop %v939
  %v941 = vadd.f32 %v940, 1.0
  %v942 = vrcp.pop %v941
  %v943 = vmul.f32 %v941, %v942
  %v944 = vsub.f32 1.0, %v943
  %v945 = vmul.f32 %v942, %v944
  %v946 = vadd.f32 %v942, %v945
  %vm947 = vweird.f32 %v941
  %vm948 = vweird.f32 %v942
  %vm949 = vmor %vm947, %vm948
  %v950 = vsel %vm949, %v942, %v946
  %v951 = vand.u32 2147483647, %v941
  %vm952 = vcmp.eq.f32.partialorder %v951, 8.507059e+37
  %v953 = vand.u32 %v941, 2147483648
  %v954 = vor.u32 1.1754944e-38, %v953
  %v955 = vsel %vm952, %v954, %v950
  %v956 = vmul.f32 1.0, %v955
  %v957 = vmul.f32 %v936, %v915
  %v958 = vadd.f32 %v679, %v957
  %v959 = vtanh.pop %v958
  %v960 = vsub.f32 1.0, %v956
  %v961 = vmul.f32 %v960, %v959
  %v962 = vmul.f32 %v956, %v856
  %v963 = vadd.f32 %v961, %v962
  %964 = vmatpush.msra.mxu0 %v711
  %965 = vmatpush.msra.mxu0 %v710
  %966 = vmatpush.msra.mxu0 %v709
  %967 = vmatpush.msra.mxu0 %v708
  %968 = vmatpush.msra.mxu0 %v707
  %969 = vmatpush.msra.mxu0 %v706
  %970 = vmatpush.msra.mxu0 %v705
  %971 = vmatpush.msra.mxu0 %v704
  %972 = vmatpush.msra.mxu0 %v703
  %973 = vmatpush.msra.mxu0 %v702
  %974 = vmatpush.msra.mxu0 %v701
  %975 = vmatpush.msra.mxu0 %v700
  %976 = vmatpush.msra.mxu0 %v699
  %977 = vmatpush.msra.mxu0 %v698
  %978 = vmatpush.msra.mxu0 %v697
  %979 = vmatpush.msra.mxu0 %v696
  %980 = vmatmul.f32.gmra.mxu0 %v963
  %v981 = vpop.f32.mrf.mxu0
  %v982 = vadd.f32 0.0, %v981
  %983 = vdwg.mxu0
  %984 = vmatpush.msra.mxu0 %v728
  %985 = vmatpush.msra.mxu0 %v727
  %986 = vmatpush.msra.mxu0 %v726
  %987 = vmatpush.msra.mxu0 %v725
  %988 = vmatpush.msra.mxu0 %v724
  %989 = vmatpush.msra.mxu0 %v723
  %990 = vmatpush.msra.mxu0 %v722
  %991 = vmatpush.msra.mxu0 %v721
  %992 = vmatpush.msra.mxu0 %v720
  %993 = vmatpush.msra.mxu0 %v719
  %994 = vmatpush.msra.mxu0 %v718
  %995 = vmatpush.msra.mxu0 %v717
  %996 = vmatpush.msra.mxu0 %v716
  %997 = vmatpush.msra.mxu0 %v715
  %998 = vmatpush.msra.mxu0 %v714
  %999 = vmatpush.msra.mxu0 %v713
  %1000 = vmatmul.f32.gmra.mxu0 %v963
  %v1001 = vpop.f32.mrf.mxu0
  %v1002 = vadd.f32 0.0, %v1001
  %1003 = vdwg.mxu0
  %1004 = vmatpush.msra.mxu0 %v745
  %1005 = vmatpush.msra.mxu0 %v744
  %1006 = vmatpush.msra.mxu0 %v743
  %1007 = vmatpush.msra.mxu0 %v742
  %1008 = vmatpush.msra.mxu0 %v741
  %1009 = vmatpush.msra.mxu0 %v740
  %1010 = vmatpush.msra.mxu0 %v739
  %1011 = vmatpush.msra.mxu0 %v738
  %1012 = vmatpush.msra.mxu0 %v737
  %1013 = vmatpush.msra.mxu0 %v736
  %1014 = vmatpush.msra.mxu0 %v735
  %1015 = vmatpush.msra.mxu0 %v734
  %1016 = vmatpush.msra.mxu0 %v733
  %1017 = vmatpush.msra.mxu0 %v732
  %1018 = vmatpush.msra.mxu0 %v731
  %1019 = vmatpush.msra.mxu0 %v730
  %1020 = vmatmul.f32.gmra.mxu0 %v963
  %v1021 = vpop.f32.mrf.mxu0
  %v1022 = vadd.f32 %v788, %v1021
  %1023 = vdwg.mxu0
  %v1024 = vadd.f32 %v484, %v982
  %v1025 = vxor.u32 %v1024, 2147483648
  %v1026 = vmul.f32 %v1025, 1.442695
  %v1027 = vpow.pop %v1026
  %v1028 = vadd.f32 %v1027, 1.0
  %v1029 = vrcp.pop %v1028
  %v1030 = vmul.f32 %v1028, %v1029
  %v1031 = vsub.f32 1.0, %v1030
  %v1032 = vmul.f32 %v1029, %v1031
  %v1033 = vadd.f32 %v1029, %v1032
  %vm1034 = vweird.f32 %v1028
  %vm1035 = vweird.f32 %v1029
  %vm1036 = vmor %vm1034, %vm1035
  %v1037 = vsel %vm1036, %v1029, %v1033
  %v1038 = vand.u32 2147483647, %v1028
  %vm1039 = vcmp.eq.f32.partialorder %v1038, 8.507059e+37
  %v1040 = vand.u32 %v1028, 2147483648
  %v1041 = vor.u32 1.1754944e-38, %v1040
  %v1042 = vsel %vm1039, %v1041, %v1037
  %v1043 = vmul.f32 1.0, %v1042
  %v1044 = vadd.f32 %v583, %v1002
  %v1045 = vxor.u32 %v1044, 2147483648
  %v1046 = vmul.f32 %v1045, 1.442695
  %v1047 = vpow.pop %v1046
  %v1048 = vadd.f32 %v1047, 1.0
  %v1049 = vrcp.pop %v1048
  %v1050 = vmul.f32 %v1048, %v1049
  %v1051 = vsub.f32 1.0, %v1050
  %v1052 = vmul.f32 %v1049, %v1051
  %v1053 = vadd.f32 %v1049, %v1052
  %vm1054 = vweird.f32 %v1048
  %vm1055 = vweird.f32 %v1049
  %vm1056 = vmor %vm1054, %vm1055
  %v1057 = vsel %vm1056, %v1049, %v1053
  %v1058 = vand.u32 2147483647, %v1048
  %vm1059 = vcmp.eq.f32.partialorder %v1058, 8.507059e+37
  %v1060 = vand.u32 %v1048, 2147483648
  %v1061 = vor.u32 1.1754944e-38, %v1060
  %v1062 = vsel %vm1059, %v1061, %v1057
  %v1063 = vmul.f32 1.0, %v1062
  %v1064 = vmul.f32 %v1043, %v1022
  %v1065 = vadd.f32 %v682, %v1064
  %v1066 = vtanh.pop %v1065
  %v1067 = vsub.f32 1.0, %v1063
  %v1068 = vmul.f32 %v1067, %v1066
  %v1069 = vmul.f32 %v1063, %v963
  %v1070 = vadd.f32 %v1068, %v1069
  %1071 = vmatpush.msra.mxu0 %v711
  %1072 = vmatpush.msra.mxu0 %v710
  %1073 = vmatpush.msra.mxu0 %v709
  %1074 = vmatpush.msra.mxu0 %v708
  %1075 = vmatpush.msra.mxu0 %v707
  %1076 = vmatpush.msra.mxu0 %v706
  %1077 = vmatpush.msra.mxu0 %v705
  %1078 = vmatpush.msra.mxu0 %v704
  %1079 = vmatpush.msra.mxu0 %v703
  %1080 = vmatpush.msra.mxu0 %v702
  %1081 = vmatpush.msra.mxu0 %v701
  %1082 = vmatpush.msra.mxu0 %v700
  %1083 = vmatpush.msra.mxu0 %v699
  %1084 = vmatpush.msra.mxu0 %v698
  %1085 = vmatpush.msra.mxu0 %v697
  %1086 = vmatpush.msra.mxu0 %v696
  %1087 = vmatmul.f32.gmra.mxu0 %v1070
  %v1088 = vpop.f32.mrf.mxu0
  %v1089 = vadd.f32 0.0, %v1088
  %1090 = vdwg.mxu0
  %1091 = vmatpush.msra.mxu0 %v728
  %1092 = vmatpush.msra.mxu0 %v727
  %1093 = vmatpush.msra.mxu0 %v726
  %1094 = vmatpush.msra.mxu0 %v725
  %1095 = vmatpush.msra.mxu0 %v724
  %1096 = vmatpush.msra.mxu0 %v723
  %1097 = vmatpush.msra.mxu0 %v722
  %1098 = vmatpush.msra.mxu0 %v721
  %1099 = vmatpush.msra.mxu0 %v720
  %1100 = vmatpush.msra.mxu0 %v719
  %1101 = vmatpush.msra.mxu0 %v718
  %1102 = vmatpush.msra.mxu0 %v717
  %1103 = vmatpush.msra.mxu0 %v716
  %1104 = vmatpush.msra.mxu0 %v715
  %1105 = vmatpush.msra.mxu0 %v714
  %1106 = vmatpush.msra.mxu0 %v713
  %1107 = vmatmul.f32.gmra.mxu0 %v1070
  %v1108 = vpop.f32.mrf.mxu0
  %v1109 = vadd.f32 0.0, %v1108
  %1110 = vdwg.mxu0
  %1111 = vmatpush.msra.mxu0 %v745
  %1112 = vmatpush.msra.mxu0 %v744
  %1113 = vmatpush.msra.mxu0 %v743
  %1114 = vmatpush.msra.mxu0 %v742
  %1115 = vmatpush.msra.mxu0 %v741
  %1116 = vmatpush.msra.mxu0 %v740
  %1117 = vmatpush.msra.mxu0 %v739
  %1118 = vmatpush.msra.mxu0 %v738
  %1119 = vmatpush.msra.mxu0 %v737
  %1120 = vmatpush.msra.mxu0 %v736
  %1121 = vmatpush.msra.mxu0 %v735
  %1122 = vmatpush.msra.mxu0 %v734
  %1123 = vmatpush.msra.mxu0 %v733
  %1124 = vmatpush.msra.mxu0 %v732
  %1125 = vmatpush.msra.mxu0 %v731
  %1126 = vmatpush.msra.mxu0 %v730
  %1127 = vmatmul.f32.gmra.mxu0 %v1070
  %v1128 = vpop.f32.mrf.mxu0
  %v1129 = vadd.f32 %v788, %v1128
  %1130 = vdwg.mxu0
  %v1131 = vadd.f32 %v486, %v1089
  %v1132 = vxor.u32 %v1131, 2147483648
  %v1133 = vmul.f32 %v1132, 1.442695
  %v1134 = vpow.pop %v1133
  %v1135 = vadd.f32 %v1134, 1.0
  %v1136 = vrcp.pop %v1135
  %v1137 = vmul.f32 %v1135, %v1136
  %v1138 = vsub.f32 1.0, %v1137
  %v1139 = vmul.f32 %v1136, %v1138
  %v1140 = vadd.f32 %v1136, %v1139
  %vm1141 = vweird.f32 %v1135
  %vm1142 = vweird.f32 %v1136
  %vm1143 = vmor %vm1141, %vm1142
  %v1144 = vsel %vm1143, %v1136, %v1140
  %v1145 = vand.u32 2147483647, %v1135
  %vm1146 = vcmp.eq.f32.partialorder %v1145, 8.507059e+37
  %v1147 = vand.u32 %v1135, 2147483648
  %v1148 = vor.u32 1.1754944e-38, %v1147
  %v1149 = vsel %vm1146, %v1148, %v1144
  %v1150 = vmul.f32 1.0, %v1149
  %v1151 = vadd.f32 %v585, %v1109
  %v1152 = vxor.u32 %v1151, 2147483648
  %v1153 = vmul.f32 %v1152, 1.442695
  %v1154 = vpow.pop %v1153
  %v1155 = vadd.f32 %v1154, 1.0
  %v1156 = vrcp.pop %v1155
  %v1157 = vmul.f32 %v1155, %v1156
  %v1158 = vsub.f32 1.0, %v1157
  %v1159 = vmul.f32 %v1156, %v1158
  %v1160 = vadd.f32 %v1156, %v1159
  %vm1161 = vweird.f32 %v1155
  %vm1162 = vweird.f32 %v1156
  %vm1163 = vmor %vm1161, %vm1162
  %v1164 = vsel %vm1163, %v1156, %v1160
  %v1165 = vand.u32 2147483647, %v1155
  %vm1166 = vcmp.eq.f32.partialorder %v1165, 8.507059e+37
  %v1167 = vand.u32 %v1155, 2147483648
  %v1168 = vor.u32 1.1754944e-38, %v1167
  %v1169 = vsel %vm1166, %v1168, %v1164
  %v1170 = vmul.f32 1.0, %v1169
  %v1171 = vmul.f32 %v1150, %v1129
  %v1172 = vadd.f32 %v684, %v1171
  %v1173 = vtanh.pop %v1172
  %v1174 = vsub.f32 1.0, %v1170
  %v1175 = vmul.f32 %v1174, %v1173
  %v1176 = vmul.f32 %v1170, %v1070
  %v1177 = vadd.f32 %v1175, %v1176
  %1178 = vmatpush.msra.mxu0 %v711
  %1179 = vmatpush.msra.mxu0 %v710
  %1180 = vmatpush.msra.mxu0 %v709
  %1181 = vmatpush.msra.mxu0 %v708
  %1182 = vmatpush.msra.mxu0 %v707
  %1183 = vmatpush.msra.mxu0 %v706
  %1184 = vmatpush.msra.mxu0 %v705
  %1185 = vmatpush.msra.mxu0 %v704
  %1186 = vmatpush.msra.mxu0 %v703
  %1187 = vmatpush.msra.mxu0 %v702
  %1188 = vmatpush.msra.mxu0 %v701
  %1189 = vmatpush.msra.mxu0 %v700
  %1190 = vmatpush.msra.mxu0 %v699
  %1191 = vmatpush.msra.mxu0 %v698
  %1192 = vmatpush.msra.mxu0 %v697
  %1193 = vmatpush.msra.mxu0 %v696
  %1194 = vmatmul.f32.gmra.mxu0 %v1177
  %v1195 = vpop.f32.mrf.mxu0
  %v1196 = vadd.f32 0.0, %v1195
  %1197 = vdwg.mxu0
  %1198 = vmatpush.msra.mxu0 %v728
  %1199 = vmatpush.msra.mxu0 %v727
  %1200 = vmatpush.msra.mxu0 %v726
  %1201 = vmatpush.msra.mxu0 %v725
  %1202 = vmatpush.msra.mxu0 %v724
  %1203 = vmatpush.msra.mxu0 %v723
  %1204 = vmatpush.msra.mxu0 %v722
  %1205 = vmatpush.msra.mxu0 %v721
  %1206 = vmatpush.msra.mxu0 %v720
  %1207 = vmatpush.msra.mxu0 %v719
  %1208 = vmatpush.msra.mxu0 %v718
  %1209 = vmatpush.msra.mxu0 %v717
  %1210 = vmatpush.msra.mxu0 %v716
  %1211 = vmatpush.msra.mxu0 %v715
  %1212 = vmatpush.msra.mxu0 %v714
  %1213 = vmatpush.msra.mxu0 %v713
  %1214 = vmatmul.f32.gmra.mxu0 %v1177
  %v1215 = vpop.f32.mrf.mxu0
  %v1216 = vadd.f32 0.0, %v1215
  %1217 = vdwg.mxu0
  %1218 = vmatpush.msra.mxu0 %v745
  %1219 = vmatpush.msra.mxu0 %v744
  %1220 = vmatpush.msra.mxu0 %v743
  %1221 = vmatpush.msra.mxu0 %v742
  %1222 = vmatpush.msra.mxu0 %v741
  %1223 = vmatpush.msra.mxu0 %v740
  %1224 = vmatpush.msra.mxu0 %v739
  %1225 = vmatpush.msra.mxu0 %v738
  %1226 = vmatpush.msra.mxu0 %v737
  %1227 = vmatpush.msra.mxu0 %v736
  %1228 = vmatpush.msra.mxu0 %v735
  %1229 = vmatpush.msra.mxu0 %v734
  %1230 = vmatpush.msra.mxu0 %v733
  %1231 = vmatpush.msra.mxu0 %v732
  %1232 = vmatpush.msra.mxu0 %v731
  %1233 = vmatpush.msra.mxu0 %v730
  %1234 = vmatmul.f32.gmra.mxu0 %v1177
  %v1235 = vpop.f32.mrf.mxu0
  %v1236 = vadd.f32 %v788, %v1235
  %1237 = vdwg.mxu0
  %v1238 = vadd.f32 %v489, %v1196
  %v1239 = vxor.u32 %v1238, 2147483648
  %v1240 = vmul.f32 %v1239, 1.442695
  %v1241 = vpow.pop %v1240
  %v1242 = vadd.f32 %v1241, 1.0
  %v1243 = vrcp.pop %v1242
  %v1244 = vmul.f32 %v1242, %v1243
  %v1245 = vsub.f32 1.0, %v1244
  %v1246 = vmul.f32 %v1243, %v1245
  %v1247 = vadd.f32 %v1243, %v1246
  %vm1248 = vweird.f32 %v1242
  %vm1249 = vweird.f32 %v1243
  %vm1250 = vmor %vm1248, %vm1249
  %v1251 = vsel %vm1250, %v1243, %v1247
  %v1252 = vand.u32 2147483647, %v1242
  %vm1253 = vcmp.eq.f32.partialorder %v1252, 8.507059e+37
  %v1254 = vand.u32 %v1242, 2147483648
  %v1255 = vor.u32 1.1754944e-38, %v1254
  %v1256 = vsel %vm1253, %v1255, %v1251
  %v1257 = vmul.f32 1.0, %v1256
  %v1258 = vadd.f32 %v588, %v1216
  %v1259 = vxor.u32 %v1258, 2147483648
  %v1260 = vmul.f32 %v1259, 1.442695
  %v1261 = vpow.pop %v1260
  %v1262 = vadd.f32 %v1261, 1.0
  %v1263 = vrcp.pop %v1262
  %v1264 = vmul.f32 %v1262, %v1263
  %v1265 = vsub.f32 1.0, %v1264
  %v1266 = vmul.f32 %v1263, %v1265
  %v1267 = vadd.f32 %v1263, %v1266
  %vm1268 = vweird.f32 %v1262
  %vm1269 = vweird.f32 %v1263
  %vm1270 = vmor %vm1268, %vm1269
  %v1271 = vsel %vm1270, %v1263, %v1267
  %v1272 = vand.u32 2147483647, %v1262
  %vm1273 = vcmp.eq.f32.partialorder %v1272, 8.507059e+37
  %v1274 = vand.u32 %v1262, 2147483648
  %v1275 = vor.u32 1.1754944e-38, %v1274
  %v1276 = vsel %vm1273, %v1275, %v1271
  %v1277 = vmul.f32 1.0, %v1276
  %v1278 = vmul.f32 %v1257, %v1236
  %v1279 = vadd.f32 %v687, %v1278
  %v1280 = vtanh.pop %v1279
  %v1281 = vsub.f32 1.0, %v1277
  %v1282 = vmul.f32 %v1281, %v1280
  %v1283 = vmul.f32 %v1277, %v1177
  %v1284 = vadd.f32 %v1282, %v1283
  %1285 = vmatpush.msra.mxu0 %v711
  %1286 = vmatpush.msra.mxu0 %v710
  %1287 = vmatpush.msra.mxu0 %v709
  %1288 = vmatpush.msra.mxu0 %v708
  %1289 = vmatpush.msra.mxu0 %v707
  %1290 = vmatpush.msra.mxu0 %v706
  %1291 = vmatpush.msra.mxu0 %v705
  %1292 = vmatpush.msra.mxu0 %v704
  %1293 = vmatpush.msra.mxu0 %v703
  %1294 = vmatpush.msra.mxu0 %v702
  %1295 = vmatpush.msra.mxu0 %v701
  %1296 = vmatpush.msra.mxu0 %v700
  %1297 = vmatpush.msra.mxu0 %v699
  %1298 = vmatpush.msra.mxu0 %v698
  %1299 = vmatpush.msra.mxu0 %v697
  %1300 = vmatpush.msra.mxu0 %v696
  %1301 = vmatmul.f32.gmra.mxu0 %v1284
  %v1302 = vpop.f32.mrf.mxu0
  %v1303 = vadd.f32 0.0, %v1302
  %1304 = vdwg.mxu0
  %1305 = vmatpush.msra.mxu0 %v728
  %1306 = vmatpush.msra.mxu0 %v727
  %1307 = vmatpush.msra.mxu0 %v726
  %1308 = vmatpush.msra.mxu0 %v725
  %1309 = vmatpush.msra.mxu0 %v724
  %1310 = vmatpush.msra.mxu0 %v723
  %1311 = vmatpush.msra.mxu0 %v722
  %1312 = vmatpush.msra.mxu0 %v721
  %1313 = vmatpush.msra.mxu0 %v720
  %1314 = vmatpush.msra.mxu0 %v719
  %1315 = vmatpush.msra.mxu0 %v718
  %1316 = vmatpush.msra.mxu0 %v717
  %1317 = vmatpush.msra.mxu0 %v716
  %1318 = vmatpush.msra.mxu0 %v715
  %1319 = vmatpush.msra.mxu0 %v714
  %1320 = vmatpush.msra.mxu0 %v713
  %1321 = vmatmul.f32.gmra.mxu0 %v1284
  %v1322 = vpop.f32.mrf.mxu0
  %v1323 = vadd.f32 0.0, %v1322
  %1324 = vdwg.mxu0
  %1325 = vmatpush.msra.mxu0 %v745
  %1326 = vmatpush.msra.mxu0 %v744
  %1327 = vmatpush.msra.mxu0 %v743
  %1328 = vmatpush.msra.mxu0 %v742
  %1329 = vmatpush.msra.mxu0 %v741
  %1330 = vmatpush.msra.mxu0 %v740
  %1331 = vmatpush.msra.mxu0 %v739
  %1332 = vmatpush.msra.mxu0 %v738
  %1333 = vmatpush.msra.mxu0 %v737
  %1334 = vmatpush.msra.mxu0 %v736
  %1335 = vmatpush.msra.mxu0 %v735
  %1336 = vmatpush.msra.mxu0 %v734
  %1337 = vmatpush.msra.mxu0 %v733
  %1338 = vmatpush.msra.mxu0 %v732
  %1339 = vmatpush.msra.mxu0 %v731
  %1340 = vmatpush.msra.mxu0 %v730
  %1341 = vmatmul.f32.gmra.mxu0 %v1284
  %v1342 = vpop.f32.mrf.mxu0
  %v1343 = vadd.f32 %v788, %v1342
  %1344 = vdwg.mxu0
  %v1345 = vadd.f32 %v491, %v1303
  %v1346 = vxor.u32 %v1345, 2147483648
  %v1347 = vmul.f32 %v1346, 1.442695
  %v1348 = vpow.pop %v1347
  %v1349 = vadd.f32 %v1348, 1.0
  %v1350 = vrcp.pop %v1349
  %v1351 = vmul.f32 %v1349, %v1350
  %v1352 = vsub.f32 1.0, %v1351
  %v1353 = vmul.f32 %v1350, %v1352
  %v1354 = vadd.f32 %v1350, %v1353
  %vm1355 = vweird.f32 %v1349
  %vm1356 = vweird.f32 %v1350
  %vm1357 = vmor %vm1355, %vm1356
  %v1358 = vsel %vm1357, %v1350, %v1354
  %v1359 = vand.u32 2147483647, %v1349
  %vm1360 = vcmp.eq.f32.partialorder %v1359, 8.507059e+37
  %v1361 = vand.u32 %v1349, 2147483648
  %v1362 = vor.u32 1.1754944e-38, %v1361
  %v1363 = vsel %vm1360, %v1362, %v1358
  %v1364 = vmul.f32 1.0, %v1363
  %v1365 = vadd.f32 %v590, %v1323
  %v1366 = vxor.u32 %v1365, 2147483648
  %v1367 = vmul.f32 %v1366, 1.442695
  %v1368 = vpow.pop %v1367
  %v1369 = vadd.f32 %v1368, 1.0
  %v1370 = vrcp.pop %v1369
  %v1371 = vmul.f32 %v1369, %v1370
  %v1372 = vsub.f32 1.0, %v1371
  %v1373 = vmul.f32 %v1370, %v1372
  %v1374 = vadd.f32 %v1370, %v1373
  %vm1375 = vweird.f32 %v1369
  %vm1376 = vweird.f32 %v1370
  %vm1377 = vmor %vm1375, %vm1376
  %v1378 = vsel %vm1377, %v1370, %v1374
  %v1379 = vand.u32 2147483647, %v1369
  %vm1380 = vcmp.eq.f32.partialorder %v1379, 8.507059e+37
  %v1381 = vand.u32 %v1369, 2147483648
  %v1382 = vor.u32 1.1754944e-38, %v1381
  %v1383 = vsel %vm1380, %v1382, %v1378
  %v1384 = vmul.f32 1.0, %v1383
  %v1385 = vmul.f32 %v1364, %v1343
  %v1386 = vadd.f32 %v689, %v1385
  %v1387 = vtanh.pop %v1386
  %v1388 = vsub.f32 1.0, %v1384
  %v1389 = vmul.f32 %v1388, %v1387
  %v1390 = vmul.f32 %v1384, %v1284
  %v1391 = vadd.f32 %v1389, %v1390
  %1392 = vmatpush.msra.mxu0 %v711
  %1393 = vmatpush.msra.mxu0 %v710
  %1394 = vmatpush.msra.mxu0 %v709
  %1395 = vmatpush.msra.mxu0 %v708
  %1396 = vmatpush.msra.mxu0 %v707
  %1397 = vmatpush.msra.mxu0 %v706
  %1398 = vmatpush.msra.mxu0 %v705
  %1399 = vmatpush.msra.mxu0 %v704
  %1400 = vmatpush.msra.mxu0 %v703
  %1401 = vmatpush.msra.mxu0 %v702
  %1402 = vmatpush.msra.mxu0 %v701
  %1403 = vmatpush.msra.mxu0 %v700
  %1404 = vmatpush.msra.mxu0 %v699
  %1405 = vmatpush.msra.mxu0 %v698
  %1406 = vmatpush.msra.mxu0 %v697
  %1407 = vmatpush.msra.mxu0 %v696
  %1408 = vmatmul.f32.gmra.mxu0 %v1391
  %v1409 = vpop.f32.mrf.mxu0
  %v1410 = vadd.f32 0.0, %v1409
  %1411 = vdwg.mxu0
  %1412 = vmatpush.msra.mxu0 %v728
  %1413 = vmatpush.msra.mxu0 %v727
  %1414 = vmatpush.msra.mxu0 %v726
  %1415 = vmatpush.msra.mxu0 %v725
  %1416 = vmatpush.msra.mxu0 %v724
  %1417 = vmatpush.msra.mxu0 %v723
  %1418 = vmatpush.msra.mxu0 %v722
  %1419 = vmatpush.msra.mxu0 %v721
  %1420 = vmatpush.msra.mxu0 %v720
  %1421 = vmatpush.msra.mxu0 %v719
  %1422 = vmatpush.msra.mxu0 %v718
  %1423 = vmatpush.msra.mxu0 %v717
  %1424 = vmatpush.msra.mxu0 %v716
  %1425 = vmatpush.msra.mxu0 %v715
  %1426 = vmatpush.msra.mxu0 %v714
  %1427 = vmatpush.msra.mxu0 %v713
  %1428 = vmatmul.f32.gmra.mxu0 %v1391
  %v1429 = vpop.f32.mrf.mxu0
  %v1430 = vadd.f32 0.0, %v1429
  %1431 = vdwg.mxu0
  %1432 = vmatpush.msra.mxu0 %v745
  %1433 = vmatpush.msra.mxu0 %v744
  %1434 = vmatpush.msra.mxu0 %v743
  %1435 = vmatpush.msra.mxu0 %v742
  %1436 = vmatpush.msra.mxu0 %v741
  %1437 = vmatpush.msra.mxu0 %v740
  %1438 = vmatpush.msra.mxu0 %v739
  %1439 = vmatpush.msra.mxu0 %v738
  %1440 = vmatpush.msra.mxu0 %v737
  %1441 = vmatpush.msra.mxu0 %v736
  %1442 = vmatpush.msra.mxu0 %v735
  %1443 = vmatpush.msra.mxu0 %v734
  %1444 = vmatpush.msra.mxu0 %v733
  %1445 = vmatpush.msra.mxu0 %v732
  %1446 = vmatpush.msra.mxu0 %v731
  %1447 = vmatpush.msra.mxu0 %v730
  %1448 = vmatmul.f32.gmra.mxu0 %v1391
  %v1449 = vpop.f32.mrf.mxu0
  %v1450 = vadd.f32 %v788, %v1449
  %1451 = vdwg.mxu0
  %v1452 = vadd.f32 %v494, %v1410
  %v1453 = vxor.u32 %v1452, 2147483648
  %v1454 = vmul.f32 %v1453, 1.442695
  %v1455 = vpow.pop %v1454
  %v1456 = vadd.f32 %v1455, 1.0
  %v1457 = vrcp.pop %v1456
  %v1458 = vmul.f32 %v1456, %v1457
  %v1459 = vsub.f32 1.0, %v1458
  %v1460 = vmul.f32 %v1457, %v1459
  %v1461 = vadd.f32 %v1457, %v1460
  %vm1462 = vweird.f32 %v1456
  %vm1463 = vweird.f32 %v1457
  %vm1464 = vmor %vm1462, %vm1463
  %v1465 = vsel %vm1464, %v1457, %v1461
  %v1466 = vand.u32 2147483647, %v1456
  %vm1467 = vcmp.eq.f32.partialorder %v1466, 8.507059e+37
  %v1468 = vand.u32 %v1456, 2147483648
  %v1469 = vor.u32 1.1754944e-38, %v1468
  %v1470 = vsel %vm1467, %v1469, %v1465
  %v1471 = vmul.f32 1.0, %v1470
  %v1472 = vadd.f32 %v593, %v1430
  %v1473 = vxor.u32 %v1472, 2147483648
  %v1474 = vmul.f32 %v1473, 1.442695
  %v1475 = vpow.pop %v1474
  %v1476 = vadd.f32 %v1475, 1.0
  %v1477 = vrcp.pop %v1476
  %v1478 = vmul.f32 %v1476, %v1477
  %v1479 = vsub.f32 1.0, %v1478
  %v1480 = vmul.f32 %v1477, %v1479
  %v1481 = vadd.f32 %v1477, %v1480
  %vm1482 = vweird.f32 %v1476
  %vm1483 = vweird.f32 %v1477
  %vm1484 = vmor %vm1482, %vm1483
  %v1485 = vsel %vm1484, %v1477, %v1481
  %v1486 = vand.u32 2147483647, %v1476
  %vm1487 = vcmp.eq.f32.partialorder %v1486, 8.507059e+37
  %v1488 = vand.u32 %v1476, 2147483648
  %v1489 = vor.u32 1.1754944e-38, %v1488
  %v1490 = vsel %vm1487, %v1489, %v1485
  %v1491 = vmul.f32 1.0, %v1490
  %v1492 = vmul.f32 %v1471, %v1450
  %v1493 = vadd.f32 %v692, %v1492
  %v1494 = vtanh.pop %v1493
  %v1495 = vsub.f32 1.0, %v1491
  %v1496 = vmul.f32 %v1495, %v1494
  %v1497 = vmul.f32 %v1491, %v1391
  %v1498 = vadd.f32 %v1496, %v1497
  %1499 = vmatpush.msra.mxu0 %v711
  %1500 = vmatpush.msra.mxu0 %v710
  %1501 = vmatpush.msra.mxu0 %v709
  %1502 = vmatpush.msra.mxu0 %v708
  %1503 = vmatpush.msra.mxu0 %v707
  %1504 = vmatpush.msra.mxu0 %v706
  %1505 = vmatpush.msra.mxu0 %v705
  %1506 = vmatpush.msra.mxu0 %v704
  %1507 = vmatpush.msra.mxu0 %v703
  %1508 = vmatpush.msra.mxu0 %v702
  %1509 = vmatpush.msra.mxu0 %v701
  %1510 = vmatpush.msra.mxu0 %v700
  %1511 = vmatpush.msra.mxu0 %v699
  %1512 = vmatpush.msra.mxu0 %v698
  %1513 = vmatpush.msra.mxu0 %v697
  %1514 = vmatpush.msra.mxu0 %v696
  %1515 = vmatmul.f32.gmra.mxu0 %v1498
  %v1516 = vpop.f32.mrf.mxu0
  %v1517 = vadd.f32 0.0, %v1516
  %1518 = vdwg.mxu0
  %1519 = vmatpush.msra.mxu0 %v728
  %1520 = vmatpush.msra.mxu0 %v727
  %1521 = vmatpush.msra.mxu0 %v726
  %1522 = vmatpush.msra.mxu0 %v725
  %1523 = vmatpush.msra.mxu0 %v724
  %1524 = vmatpush.msra.mxu0 %v723
  %1525 = vmatpush.msra.mxu0 %v722
  %1526 = vmatpush.msra.mxu0 %v721
  %1527 = vmatpush.msra.mxu0 %v720
  %1528 = vmatpush.msra.mxu0 %v719
  %1529 = vmatpush.msra.mxu0 %v718
  %1530 = vmatpush.msra.mxu0 %v717
  %1531 = vmatpush.msra.mxu0 %v716
  %1532 = vmatpush.msra.mxu0 %v715
  %1533 = vmatpush.msra.mxu0 %v714
  %1534 = vmatpush.msra.mxu0 %v713
  %1535 = vmatmul.f32.gmra.mxu0 %v1498
  %v1536 = vpop.f32.mrf.mxu0
  %v1537 = vadd.f32 0.0, %v1536
  %1538 = vdwg.mxu0
  %1539 = vmatpush.msra.mxu0 %v745
  %1540 = vmatpush.msra.mxu0 %v744
  %1541 = vmatpush.msra.mxu0 %v743
  %1542 = vmatpush.msra.mxu0 %v742
  %1543 = vmatpush.msra.mxu0 %v741
  %1544 = vmatpush.msra.mxu0 %v740
  %1545 = vmatpush.msra.mxu0 %v739
  %1546 = vmatpush.msra.mxu0 %v738
  %1547 = vmatpush.msra.mxu0 %v737
  %1548 = vmatpush.msra.mxu0 %v736
  %1549 = vmatpush.msra.mxu0 %v735
  %1550 = vmatpush.msra.mxu0 %v734
  %1551 = vmatpush.msra.mxu0 %v733
  %1552 = vmatpush.msra.mxu0 %v732
  %1553 = vmatpush.msra.mxu0 %v731
  %1554 = vmatpush.msra.mxu0 %v730
  %1555 = vmatmul.f32.gmra.mxu0 %v1498
  %v1556 = vpop.f32.mrf.mxu0
  %v1557 = vadd.f32 %v788, %v1556
  %1558 = vdwg.mxu0
  %v1559 = vadd.f32 %v496, %v1517
  %v1560 = vxor.u32 %v1559, 2147483648
  %v1561 = vmul.f32 %v1560, 1.442695
  %v1562 = vpow.pop %v1561
  %v1563 = vadd.f32 %v1562, 1.0
  %v1564 = vrcp.pop %v1563
  %v1565 = vmul.f32 %v1563, %v1564
  %v1566 = vsub.f32 1.0, %v1565
  %v1567 = vmul.f32 %v1564, %v1566
  %v1568 = vadd.f32 %v1564, %v1567
  %vm1569 = vweird.f32 %v1563
  %vm1570 = vweird.f32 %v1564
  %vm1571 = vmor %vm1569, %vm1570
  %v1572 = vsel %vm1571, %v1564, %v1568
  %v1573 = vand.u32 2147483647, %v1563
  %vm1574 = vcmp.eq.f32.partialorder %v1573, 8.507059e+37
  %v1575 = vand.u32 %v1563, 2147483648
  %v1576 = vor.u32 1.1754944e-38, %v1575
  %v1577 = vsel %vm1574, %v1576, %v1572
  %v1578 = vmul.f32 1.0, %v1577
  %v1579 = vadd.f32 %v595, %v1537
  %v1580 = vxor.u32 %v1579, 2147483648
  %v1581 = vmul.f32 %v1580, 1.442695
  %v1582 = vpow.pop %v1581
  %v1583 = vadd.f32 %v1582, 1.0
  %v1584 = vrcp.pop %v1583
  %v1585 = vmul.f32 %v1583, %v1584
  %v1586 = vsub.f32 1.0, %v1585
  %v1587 = vmul.f32 %v1584, %v1586
  %v1588 = vadd.f32 %v1584, %v1587
  %vm1589 = vweird.f32 %v1583
  %vm1590 = vweird.f32 %v1584
  %vm1591 = vmor %vm1589, %vm1590
  %v1592 = vsel %vm1591, %v1584, %v1588
  %v1593 = vand.u32 2147483647, %v1583
  %vm1594 = vcmp.eq.f32.partialorder %v1593, 8.507059e+37
  %v1595 = vand.u32 %v1583, 2147483648
  %v1596 = vor.u32 1.1754944e-38, %v1595
  %v1597 = vsel %vm1594, %v1596, %v1592
  %v1598 = vmul.f32 1.0, %v1597
  %v1599 = vmul.f32 %v1578, %v1557
  %v1600 = vadd.f32 %v694, %v1599
  %v1601 = vtanh.pop %v1600
  %v1602 = vsub.f32 1.0, %v1598
  %v1603 = vmul.f32 %v1602, %v1601
  %v1604 = vmul.f32 %v1598, %v1498
  %v1605 = vadd.f32 %v1603, %v1604
  %v1606 = vpack.c.bf16 %v1605, %v1605
  %v1607 = vld [vmem:[%s8] sm:$0xf]
  %v1608 = vld [vmem:[%s8 + $0x4] sm:$0xf]
  %v1609 = vld [vmem:[%s8 + $0x8] sm:$0xf]
  %v1610 = vld [vmem:[%s8 + $0xc] sm:$0xf]
  %v1611 = vld [vmem:[%s8 + $0x10] sm:$0xf]
  %v1612 = vld [vmem:[%s8 + $0x14] sm:$0xf]
  %v1613 = vld [vmem:[%s8 + $0x18] sm:$0xf]
  %v1614 = vld [vmem:[%s8 + $0x1c] sm:$0xf]
  %v1615 = vld [vmem:[%s8 + $0x20] sm:$0xf]
  %v1616 = vld [vmem:[%s8 + $0x24] sm:$0xf]
  %v1617 = vld [vmem:[%s8 + $0x28] sm:$0xf]
  %v1618 = vld [vmem:[%s8 + $0x2c] sm:$0xf]
  %v1619 = vld [vmem:[%s8 + $0x30] sm:$0xf]
  %v1620 = vld [vmem:[%s8 + $0x34] sm:$0xf]
  %v1621 = vld [vmem:[%s8 + $0x38] sm:$0xf]
  %v1622 = vld [vmem:[%s8 + $0x3c] sm:$0xf]
  %v1623 = vld [vmem:[%s9] sm:$0x1]
  %v1625 = vperm.slane %v1623, 0
  %v1643 = vunpack.c.l.b16 %v1607
  %v1644 = vunpack.c.l.b16 %v1608
  %v1645 = vunpack.c.l.b16 %v1609
  %v1646 = vunpack.c.l.b16 %v1610
  %v1647 = vunpack.c.l.b16 %v1611
  %v1648 = vunpack.c.l.b16 %v1612
  %v1649 = vunpack.c.l.b16 %v1613
  %v1650 = vunpack.c.l.b16 %v1614
  %v1651 = vunpack.c.l.b16 %v1615
  %v1652 = vunpack.c.l.b16 %v1616
  %v1653 = vunpack.c.l.b16 %v1617
  %v1654 = vunpack.c.l.b16 %v1618
  %v1655 = vunpack.c.l.b16 %v1619
  %v1656 = vunpack.c.l.b16 %v1620
  %v1657 = vunpack.c.l.b16 %v1621
  %v1658 = vunpack.c.l.b16 %v1622
  %v1659 = vpack.c.b16 %v1644, %v1643
  %v1660 = vpack.c.b16 %v1646, %v1645
  %v1661 = vpack.c.b16 %v1648, %v1647
  %v1662 = vpack.c.b16 %v1650, %v1649
  %v1663 = vpack.c.b16 %v1652, %v1651
  %v1664 = vpack.c.b16 %v1654, %v1653
  %v1665 = vpack.c.b16 %v1656, %v1655
  %v1666 = vpack.c.b16 %v1658, %v1657
  %1675 = vmatpush.bf16.msra.mxu0 %v1666
  %1676 = vmatpush.bf16.msra.mxu0 %v1665
  %1677 = vmatpush.bf16.msra.mxu0 %v1664
  %1678 = vmatpush.bf16.msra.mxu0 %v1663
  %1679 = vmatpush.bf16.msra.mxu0 %v1662
  %1680 = vmatpush.bf16.msra.mxu0 %v1661
  %1681 = vmatpush.bf16.msra.mxu0 %v1660
  %1682 = vmatpush.bf16.msra.mxu0 %v1659
  %1683 = vmatmul.bf16.gmra.mxu0 %v1606
  %v1684 = vpop.f32.mrf.mxu0
  %v1685 = vadd.f32 %v1625, %v1684
  %v1686 = vpop.f32.mrf.mxu0
  %1687 = vdwg.mxu0
  %v1688 = vadd.f32 %v366, %v1685
  %v1689 = vpack.c.bf16 %v1688, %v1688
  %v1690 = vld [vmem:[%s10] sm:$0xf]
  %v1691 = vld [vmem:[%s10 + $0x4] sm:$0xf]
  %v1692 = vld [vmem:[%s10 + $0x8] sm:$0xf]
  %v1693 = vld [vmem:[%s10 + $0xc] sm:$0xf]
  %v1694 = vld [vmem:[%s10 + $0x10] sm:$0xf]
  %v1695 = vld [vmem:[%s10 + $0x14] sm:$0xf]
  %v1696 = vld [vmem:[%s10 + $0x18] sm:$0xf]
  %v1697 = vld [vmem:[%s10 + $0x1c] sm:$0xf]
  %v1698 = vld [vmem:[%s10 + $0x20] sm:$0xf]
  %v1699 = vld [vmem:[%s10 + $0x24] sm:$0xf]
  %v1700 = vld [vmem:[%s10 + $0x28] sm:$0xf]
  %v1701 = vld [vmem:[%s10 + $0x2c] sm:$0xf]
  %v1702 = vld [vmem:[%s10 + $0x30] sm:$0xf]
  %v1703 = vld [vmem:[%s10 + $0x34] sm:$0xf]
  %v1704 = vld [vmem:[%s10 + $0x38] sm:$0xf]
  %v1705 = vld [vmem:[%s10 + $0x3c] sm:$0xf]
  %v1706 = vld [vmem:[%s11] sm:$0x1]
  %v1708 = vperm.slane %v1706, 0
  %v1726 = vunpack.c.l.b16 %v1690
  %v1727 = vunpack.c.l.b16 %v1691
  %v1728 = vunpack.c.l.b16 %v1692
  %v1729 = vunpack.c.l.b16 %v1693
  %v1730 = vunpack.c.l.b16 %v1694
  %v1731 = vunpack.c.l.b16 %v1695
  %v1732 = vunpack.c.l.b16 %v1696
  %v1733 = vunpack.c.l.b16 %v1697
  %v1734 = vunpack.c.l.b16 %v1698
  %v1735 = vunpack.c.l.b16 %v1699
  %v1736 = vunpack.c.l.b16 %v1700
  %v1737 = vunpack.c.l.b16 %v1701
  %v1738 = vunpack.c.l.b16 %v1702
  %v1739 = vunpack.c.l.b16 %v1703
  %v1740 = vunpack.c.l.b16 %v1704
  %v1741 = vunpack.c.l.b16 %v1705
  %v1742 = vpack.c.b16 %v1727, %v1726
  %v1743 = vpack.c.b16 %v1729, %v1728
  %v1744 = vpack.c.b16 %v1731, %v1730
  %v1745 = vpack.c.b16 %v1733, %v1732
  %v1746 = vpack.c.b16 %v1735, %v1734
  %v1747 = vpack.c.b16 %v1737, %v1736
  %v1748 = vpack.c.b16 %v1739, %v1738
  %v1749 = vpack.c.b16 %v1741, %v1740
  %1758 = vmatpush.bf16.msra.mxu0 %v1749
  %1759 = vmatpush.bf16.msra.mxu0 %v1748
  %1760 = vmatpush.bf16.msra.mxu0 %v1747
  %1761 = vmatpush.bf16.msra.mxu0 %v1746
  %1762 = vmatpush.bf16.msra.mxu0 %v1745
  %1763 = vmatpush.bf16.msra.mxu0 %v1744
  %1764 = vmatpush.bf16.msra.mxu0 %v1743
  %1765 = vmatpush.bf16.msra.mxu0 %v1742
  %1766 = vmatmul.bf16.gmra.mxu0 %v1689
  %v1767 = vpop.f32.mrf.mxu0
  %v1768 = vadd.f32 %v1708, %v1767
  %v1769 = vpop.f32.mrf.mxu0
  %1770 = vdwg.mxu0
  %1771 = vst [vmem:[%s12] sm:$0xff] %v1768
  // Predicated region
  $region50: #{model_forward.1} parent=0 // pred_check
    _
  $region51: #{model_forward.1} parent=0 // pred_check_branch
    %1773 = sbr.rel (0) target = $region53
  $region52: #{model_forward.1} parent=0 // pred_region
    _
  $region53: #{model_forward.1} parent=0 // pred_fallthru
    _
  // Predicated region
  $region54: #{model_forward.1} parent=0 // pred_check
    _
  $region55: #{model_forward.1} parent=0 // pred_check_branch
    %1775 = sbr.rel (0) target = $region57
  $region56: #{model_forward.1} parent=0 // pred_region
    _
  $region57: #{model_forward.1} parent=0 // pred_fallthru
    _

</llo_original>
